<compile_context>
chip_gen: v7x
topology: tpu7x:2x2x1
jax: 0.10.0
libtpu: 0.0.40
codegen_flags: <defaults>
</compile_context>

<pallas_src>
import jax
import jax.numpy as jnp
from jax.experimental import pallas as pl
from jax.experimental.pallas import tpu as pltpu

# ---------------------------------------------------------------------------
# problem sizes (small, consistent with the module's forward; B=1 implied)
# ---------------------------------------------------------------------------
B = 1
C_IN = 4
C_OUT = 4        # segmentation classes
H = W = 16
HID = 32
N_SAMPLES = 8
DROP_P = 0.25    # MC-dropout probability of the synthesized model
P = B * H * W    # 256 flattened pixels (lane axis)

_KEEP_SCALE = 1.0 / (1.0 - DROP_P)        # inverted-dropout scaling
_DROP_THRESH = int(DROP_P * (1 << 23))    # drop iff rnd < thresh (exact for p=0.25)


# ---------------------------------------------------------------------------
# Fused kernel: deterministic head + MC-dropout entropy score, one shot.
# Layout is (channels, pixels) so the wide dim (P / S*P) is lane-dense.
# ---------------------------------------------------------------------------
def fused_kernel(x_ref, w1_ref, b1_ref, w2_ref, b2_ref, rnd_ref,
                 score_ref, net_ref):
    # ---- shared first layer (dropout independent) -------------------------
    h = jnp.dot(w1_ref[...], x_ref[...], preferred_element_type=jnp.float32)
    h = jnp.maximum(h + b1_ref[...], 0.0)                        # (HID, P)

    # ---- deterministic head -> net_out ------------------------------------
    net = jnp.dot(w2_ref[...], h, preferred_element_type=jnp.float32)
    net_ref[...] = (net + b2_ref[...]).astype(net_ref.dtype)     # (C_OUT, P)

    # ---- MC dropout: all samples lane-stacked into ONE matmul -------------
    h_rep = jnp.concatenate([h] * N_SAMPLES, axis=1)             # (HID, S*P)
    keep = rnd_ref[...] >= _DROP_THRESH                          # Bernoulli(1-p)
    h_mc = jnp.where(keep, h_rep * _KEEP_SCALE, 0.0)
    logits = jnp.dot(w2_ref[...], h_mc,
                     preferred_element_type=jnp.float32) + b2_ref[...]  # (C_OUT, S*P)

    # softmax over the channel (sublane) axis
    m = jnp.max(logits, axis=0, keepdims=True)
    e = jnp.exp(logits - m)
    probs = e / jnp.sum(e, axis=0, keepdims=True)                # (C_OUT, S*P)

    # mean prob over samples via static 256-wide (lane-aligned) slices
    pm = probs[:, 0:P]
    for s in range(1, N_SAMPLES):
        pm = pm + probs[:, s * P:(s + 1) * P]
    pm = pm * (1.0 / N_SAMPLES)                                  # (C_OUT, P)

    # per-pixel predictive entropy + Frobenius norm over (H, W)
    ent = -jnp.sum(pm * jnp.log(jnp.maximum(pm, 1e-30)),
                   axis=0, keepdims=True)                        # (1, P)
    score_ref[0] = jnp.sqrt(jnp.sum(ent * ent))


# ---------------------------------------------------------------------------
# Wrapper
# ---------------------------------------------------------------------------
@jax.jit
def dropout_entropy_detector_forward(x_nchw, w1, b1, w2, b2, rnd):
    # lane-dense (C, P) layout; for B=1 this is a pure reshape (no transpose)
    x2d = x_nchw.reshape(C_IN, H * W)

    score, net2d = pl.pallas_call(
        fused_kernel,
        out_shape=(jax.ShapeDtypeStruct((1,), jnp.float32),
                   jax.ShapeDtypeStruct((C_OUT, P), jnp.float32)),
        in_specs=[pl.BlockSpec(memory_space=pltpu.MemorySpace.VMEM)] * 6,
        out_specs=(pl.BlockSpec(memory_space=pltpu.MemorySpace.SMEM),
                   pl.BlockSpec(memory_space=pltpu.MemorySpace.VMEM)),
    )(x2d, w1, b1, w2, b2, rnd)

    net_out = net2d.reshape(B, C_OUT, H, W)   # reshape only, no transpose
    return score, net_out


# ---------------------------------------------------------------------------
# main
# ---------------------------------------------------------------------------
if __name__ == "__main__":
    key = jax.random.PRNGKey(0)
    k_x, k_w1, k_b1, k_w2, k_b2, k_rnd = jax.random.split(key, 6)

    x = jax.random.normal(k_x, (B, C_IN, H, W), dtype=jnp.float32)

    # synthesized model parameters (lane-dense (out_ch, in_ch) layout)
    w1 = jax.random.normal(k_w1, (HID, C_IN), dtype=jnp.float32) * 0.2
    b1 = jax.random.normal(k_b1, (HID, 1), dtype=jnp.float32) * 0.05
    w2 = jax.random.normal(k_w2, (C_OUT, HID), dtype=jnp.float32) * 0.2
    b2 = jax.random.normal(k_b2, (C_OUT, 1), dtype=jnp.float32) * 0.05

    # MC-dropout randomness: uniform int32 in [0, 2^23); lane block s holds
    # sample s's independent per-element draws.
    rnd = jax.random.randint(k_rnd, (HID, N_SAMPLES * P), 0, 1 << 23,
                             dtype=jnp.int32)

    score, net_out = dropout_entropy_detector_forward(x, w1, b1, w2, b2, rnd)
    jax.block_until_ready((score, net_out))

    # ---- pure-JAX reference (same randomness, bit-identical semantics) ----
    x2d = x.reshape(C_IN, H * W)
    h_ref = jnp.maximum(w1 @ x2d + b1, 0.0)
    net_ref = (w2 @ h_ref + b2).reshape(B, C_OUT, H, W)

    h_rep = jnp.concatenate([h_ref] * N_SAMPLES, axis=1)
    h_mc = jnp.where(rnd >= _DROP_THRESH, h_rep * _KEEP_SCALE, 0.0)
    logits = w2 @ h_mc + b2
    probs = jax.nn.softmax(logits, axis=0)
    pm = probs.reshape(C_OUT, N_SAMPLES, P).mean(axis=1)
    ent = -jnp.sum(pm * jnp.log(jnp.maximum(pm, 1e-30)), axis=0)
    score_expect = jnp.sqrt(jnp.sum(ent * ent))

    assert net_out.shape == (B, C_OUT, H, W)
    assert score.shape == (1,)
    assert jnp.allclose(net_out, net_ref, atol=1e-3, rtol=1e-3)
    assert jnp.allclose(score[0], score_expect, atol=1e-3, rtol=1e-3)
    assert bool(jnp.isfinite(score[0])) and float(score[0]) >= 0.0

    print("KERNEL_OK")
</pallas_src>

<mosaic_0001>
module attributes {stable_mosaic.version = 11 : i64} {
  func.func @fused_kernel(%arg0: memref<4x256xf32, #tpu.memory_space<vmem>>, %arg1: memref<32x4xf32, #tpu.memory_space<vmem>>, %arg2: memref<32x1xf32, #tpu.memory_space<vmem>>, %arg3: memref<4x32xf32, #tpu.memory_space<vmem>>, %arg4: memref<4x1xf32, #tpu.memory_space<vmem>>, %arg5: memref<32x2048xi32, #tpu.memory_space<vmem>>, %arg6: memref<1xf32, #tpu.memory_space<smem>>, %arg7: memref<4x256xf32, #tpu.memory_space<vmem>>) attributes {dimension_semantics = [], scalar_prefetch = 0 : i64, scratch_operands = 0 : i64, tpu.core_type = #tpu.core_type<tc>} {
    %c0 = arith.constant 0 : index
    %c0_0 = arith.constant 0 : index
    %0 = vector.load %arg1[%c0, %c0_0] : memref<32x4xf32, #tpu.memory_space<vmem>>, vector<32x4xf32>
    %c0_1 = arith.constant 0 : index
    %c0_2 = arith.constant 0 : index
    %1 = vector.load %arg0[%c0_1, %c0_2] : memref<4x256xf32, #tpu.memory_space<vmem>>, vector<4x256xf32>
    %cst = arith.constant dense<0.000000e+00> : vector<32x256xf32>
    %2 = tpu.matmul %0, %1, %cst {dimension_numbers = #tpu.dot_dimension_numbers<[1], [0], [0], [1], [0, 0, 1, 1], [], []>} : vector<32x4xf32>, vector<4x256xf32>, vector<32x256xf32> -> vector<32x256xf32>
    %c0_3 = arith.constant 0 : index
    %c0_4 = arith.constant 0 : index
    %3 = vector.load %arg2[%c0_3, %c0_4] : memref<32x1xf32, #tpu.memory_space<vmem>>, vector<32x1xf32>
    %4 = vector.broadcast %3 : vector<32x1xf32> to vector<32x256xf32>
    %5 = arith.addf %2, %4 : vector<32x256xf32>
    %cst_5 = arith.constant 0.000000e+00 : f32
    %6 = vector.broadcast %cst_5 : f32 to vector<32x256xf32>
    %7 = arith.maximumf %5, %6 : vector<32x256xf32>
    %c0_6 = arith.constant 0 : index
    %c0_7 = arith.constant 0 : index
    %8 = vector.load %arg3[%c0_6, %c0_7] : memref<4x32xf32, #tpu.memory_space<vmem>>, vector<4x32xf32>
    %cst_8 = arith.constant dense<0.000000e+00> : vector<4x256xf32>
    %9 = tpu.matmul %8, %7, %cst_8 {dimension_numbers = #tpu.dot_dimension_numbers<[1], [0], [0], [1], [0, 0, 1, 1], [], []>} : vector<4x32xf32>, vector<32x256xf32>, vector<4x256xf32> -> vector<4x256xf32>
    %c0_9 = arith.constant 0 : index
    %c0_10 = arith.constant 0 : index
    %10 = vector.load %arg4[%c0_9, %c0_10] : memref<4x1xf32, #tpu.memory_space<vmem>>, vector<4x1xf32>
    %11 = vector.broadcast %10 : vector<4x1xf32> to vector<4x256xf32>
    %12 = arith.addf %9, %11 : vector<4x256xf32>
    %c0_11 = arith.constant 0 : index
    %c0_12 = arith.constant 0 : index
    %13 = vector.load %arg7[%c0_11, %c0_12] : memref<4x256xf32, #tpu.memory_space<vmem>>, vector<4x256xf32>
    tpu.vector_store %arg7[%c0_11, %c0_12], %12 {strides = array<i32>} : memref<4x256xf32, #tpu.memory_space<vmem>>, vector<4x256xf32>,
    %14 = tpu.concatenate %7, %7, %7, %7, %7, %7, %7, %7 in 1 : vector<32x256xf32>, vector<32x256xf32>, vector<32x256xf32>, vector<32x256xf32>, vector<32x256xf32>, vector<32x256xf32>, vector<32x256xf32>, vector<32x256xf32> -> vector<32x2048xf32>
    %c0_13 = arith.constant 0 : index
    %c0_14 = arith.constant 0 : index
    %15 = vector.load %arg5[%c0_13, %c0_14] : memref<32x2048xi32, #tpu.memory_space<vmem>>, vector<32x2048xi32>
    %c2097152_i32 = arith.constant 2097152 : i32
    %16 = vector.broadcast %c2097152_i32 : i32 to vector<32x2048xi32>
    %17 = arith.cmpi sge, %15, %16 : vector<32x2048xi32>
    %cst_15 = arith.constant 1.33333337 : f32
    %18 = vector.broadcast %cst_15 : f32 to vector<32x2048xf32>
    %19 = arith.mulf %14, %18 : vector<32x2048xf32>
    %cst_16 = arith.constant 0.000000e+00 : f32
    %20 = vector.broadcast %cst_16 : f32 to vector<32x2048xf32>
    %21 = arith.select %17, %19, %20 : vector<32x2048xi1>, vector<32x2048xf32>
    %c0_17 = arith.constant 0 : index
    %c0_18 = arith.constant 0 : index
    %22 = vector.load %arg3[%c0_17, %c0_18] : memref<4x32xf32, #tpu.memory_space<vmem>>, vector<4x32xf32>
    %cst_19 = arith.constant dense<0.000000e+00> : vector<4x2048xf32>
    %23 = tpu.matmul %22, %21, %cst_19 {dimension_numbers = #tpu.dot_dimension_numbers<[1], [0], [0], [1], [0, 0, 1, 1], [], []>} : vector<4x32xf32>, vector<32x2048xf32>, vector<4x2048xf32> -> vector<4x2048xf32>
    %c0_20 = arith.constant 0 : index
    %c0_21 = arith.constant 0 : index
    %24 = vector.load %arg4[%c0_20, %c0_21] : memref<4x1xf32, #tpu.memory_space<vmem>>, vector<4x1xf32>
    %25 = vector.broadcast %24 : vector<4x1xf32> to vector<4x2048xf32>
    %26 = arith.addf %23, %25 : vector<4x2048xf32>
    %cst_22 = arith.constant dense<0xFF800000> : vector<2048xf32>
    %27 = vector.multi_reduction <maximumf>, %26, %cst_22 [0] : vector<4x2048xf32> to vector<2048xf32>
    %28 = vector.shape_cast %27 : vector<2048xf32> to vector<1x2048xf32>
    %29 = vector.broadcast %28 : vector<1x2048xf32> to vector<4x2048xf32>
    %30 = arith.subf %26, %29 : vector<4x2048xf32>
    %31 = math.exp %30 : vector<4x2048xf32>
    %cst_23 = arith.constant dense<0.000000e+00> : vector<2048xf32>
    %32 = vector.multi_reduction <add>, %31, %cst_23 [0] : vector<4x2048xf32> to vector<2048xf32>
    %33 = vector.shape_cast %32 : vector<2048xf32> to vector<1x2048xf32>
    %34 = vector.broadcast %33 : vector<1x2048xf32> to vector<4x2048xf32>
    %35 = arith.divf %31, %34 : vector<4x2048xf32>
    %36 = vector.extract_strided_slice %35 {offsets = [0, 0], sizes = [4, 256], strides = [1, 1]} : vector<4x2048xf32> to vector<4x256xf32>
    %37 = vector.extract_strided_slice %35 {offsets = [0, 256], sizes = [4, 256], strides = [1, 1]} : vector<4x2048xf32> to vector<4x256xf32>
    %38 = arith.addf %36, %37 : vector<4x256xf32>
    %39 = vector.extract_strided_slice %35 {offsets = [0, 512], sizes = [4, 256], strides = [1, 1]} : vector<4x2048xf32> to vector<4x256xf32>
    %40 = arith.addf %38, %39 : vector<4x256xf32>
    %41 = vector.extract_strided_slice %35 {offsets = [0, 768], sizes = [4, 256], strides = [1, 1]} : vector<4x2048xf32> to vector<4x256xf32>
    %42 = arith.addf %40, %41 : vector<4x256xf32>
    %43 = vector.extract_strided_slice %35 {offsets = [0, 1024], sizes = [4, 256], strides = [1, 1]} : vector<4x2048xf32> to vector<4x256xf32>
    %44 = arith.addf %42, %43 : vector<4x256xf32>
    %45 = vector.extract_strided_slice %35 {offsets = [0, 1280], sizes = [4, 256], strides = [1, 1]} : vector<4x2048xf32> to vector<4x256xf32>
    %46 = arith.addf %44, %45 : vector<4x256xf32>
    %47 = vector.extract_strided_slice %35 {offsets = [0, 1536], sizes = [4, 256], strides = [1, 1]} : vector<4x2048xf32> to vector<4x256xf32>
    %48 = arith.addf %46, %47 : vector<4x256xf32>
    %49 = vector.extract_strided_slice %35 {offsets = [0, 1792], sizes = [4, 256], strides = [1, 1]} : vector<4x2048xf32> to vector<4x256xf32>
    %50 = arith.addf %48, %49 : vector<4x256xf32>
    %cst_24 = arith.constant 1.250000e-01 : f32
    %51 = vector.broadcast %cst_24 : f32 to vector<4x256xf32>
    %52 = arith.mulf %50, %51 : vector<4x256xf32>
    %cst_25 = arith.constant 1.000000e-30 : f32
    %53 = vector.broadcast %cst_25 : f32 to vector<4x256xf32>
    %54 = arith.maximumf %52, %53 : vector<4x256xf32>
    %55 = math.log %54 : vector<4x256xf32>
    %56 = arith.mulf %52, %55 : vector<4x256xf32>
    %cst_26 = arith.constant dense<0.000000e+00> : vector<256xf32>
    %57 = vector.multi_reduction <add>, %56, %cst_26 [0] : vector<4x256xf32> to vector<256xf32>
    %58 = vector.shape_cast %57 : vector<256xf32> to vector<1x256xf32>
    %cst_27 = arith.constant 0.000000e+00 : f32
    %59 = vector.broadcast %cst_27 : f32 to vector<1x256xf32>
    %60 = arith.subf %59, %58 : vector<1x256xf32>
    %61 = arith.mulf %60, %60 : vector<1x256xf32>
    %62 = vector.shape_cast %61 : vector<1x256xf32> to vector<1x1x256xf32>
    %cst_28 = arith.constant dense<0.000000e+00> : vector<1xf32>
    %63 = vector.multi_reduction <add>, %62, %cst_28 [1, 2] : vector<1x1x256xf32> to vector<1xf32>
    %64 = vector.shape_cast %63 : vector<1xf32> to vector<1x1x1xf32>
    %65 = vector.extract %64[0, 0, 0] : f32 from vector<1x1x1xf32>
    %66 = math.sqrt %65 : f32
    %c0_29 = arith.constant 0 : index
    %67 = memref.load %arg6[%c0_29] : memref<1xf32, #tpu.memory_space<smem>>
    memref.store %66, %arg6[%c0_29] : memref<1xf32, #tpu.memory_space<smem>>
    return
  }
}

</mosaic_0001>

<llo_original>
// kernel: dropout_entropy_detector_forward.1
$region0: #{dropout_entropy_detector_forward.1}
  #allocation0 [shape = 'u32[]', space=smem, size = 0x4, offset = 0x4, fixed_abs, tag = 'smem constant byte address 0x4 - core index']
  #allocation1 [shape = 'u32[144,128]{1,0:T(1,128)}', space=vmem, size = 0x12000, scoped, tag = 'internal scratch']
  %s0 = inlined_call_operand.vmem [shape: f32[4,256], index: 0, kind: input, shape index: {}]
  %s1 = inlined_call_operand.vmem [shape: f32[32,4], index: 1, kind: input, shape index: {}]
  %s2 = inlined_call_operand.vmem [shape: f32[32,1], index: 2, kind: input, shape index: {}]
  %s3 = inlined_call_operand.vmem [shape: f32[4,32], index: 3, kind: input, shape index: {}]
  %s4 = inlined_call_operand.vmem [shape: f32[4,1], index: 4, kind: input, shape index: {}]
  %s5 = inlined_call_operand.hbm [shape: s32[32,2048], index: 5, kind: input, shape index: {}]
  %s6 = inlined_call_operand.hbm [shape: f32[1], index: 6, kind: output, shape index: {0}]
  %s7 = inlined_call_operand.vmem [shape: f32[4,256], index: 7, kind: output, shape index: {1}]
  %8 = xla_tuple %s6, %s7
  %s9 = sld [smem:[#allocation0]]
  $region46: #{dropout_entropy_detector_forward.1} parent=0
    _
  %s11 = ssub.s32 1, %s9
  %s12 = scalar_select 0, %s11, %s9
  $region1: #{dropout_entropy_detector_forward.1} parent=0
    #allocation2 [shape = 'u8[262144]{0}', space=vmem, size = 0x40000, scoped, tag = 'input window, operand 5, single buffered']
    #allocation3 [shape = 's32[1]{0}', space=sflag, size = 0x4, scoped, tag = 'scoped memory for dropout_entropy_detector_forward.1']
    #allocation4 [shape = 's32[1]{0}', space=sflag, size = 0x4, scoped, tag = 'scoped memory for dropout_entropy_detector_forward.1']
    #allocation5 [shape = 'u8[512]{0}', space=smem, size = 0x200, scoped, tag = 'output window, operand 0, single buffered']
    %13 = vsyncpa [#allocation3], 0
    %14 = vsyncpa [#allocation4], 0
    // Predicated region
    $region2: #{dropout_entropy_detector_forward.1} parent=1 // pred_check
      _
    $region3: #{dropout_entropy_detector_forward.1} parent=1 // pred_check_branch
      %16 = sbr.rel (0) target = $region5
    $region4: #{dropout_entropy_detector_forward.1} parent=1 // pred_region
      _
    $region5: #{dropout_entropy_detector_forward.1} parent=1 // pred_fallthru
      _
    // Predicated region
    $region6: #{dropout_entropy_detector_forward.1} parent=1 // pred_check
      _
    $region7: #{dropout_entropy_detector_forward.1} parent=1 // pred_check_branch
      %18 = sbr.rel (0) target = $region9
    $region8: #{dropout_entropy_detector_forward.1} parent=1 // pred_region
      _
    $region9: #{dropout_entropy_detector_forward.1} parent=1 // pred_fallthru
      _
    // Predicated region
    $region10: #{dropout_entropy_detector_forward.1} parent=1 // pred_check
      _
    $region11: #{dropout_entropy_detector_forward.1} parent=1 // pred_check_branch
      %20 = sbr.rel (0) target = $region13
    $region12: #{dropout_entropy_detector_forward.1} parent=1 // pred_region
      _
    $region13: #{dropout_entropy_detector_forward.1} parent=1 // pred_fallthru
      _
    // Predicated region
    $region14: #{dropout_entropy_detector_forward.1} parent=1 // pred_check
      _
    $region15: #{dropout_entropy_detector_forward.1} parent=1 // pred_check_branch
      %22 = sbr.rel (0) target = $region17
    $region16: #{dropout_entropy_detector_forward.1} parent=1 // pred_region
      _
    $region17: #{dropout_entropy_detector_forward.1} parent=1 // pred_fallthru
      _
    // Predicated region
    $region18: #{dropout_entropy_detector_forward.1} parent=1 // pred_check
      _
    $region19: #{dropout_entropy_detector_forward.1} parent=1 // pred_check_branch
      %24 = sbr.rel (0) target = $region21
    $region20: #{dropout_entropy_detector_forward.1} parent=1 // pred_region
      _
    $region21: #{dropout_entropy_detector_forward.1} parent=1 // pred_fallthru
      _
    // Predicated region
    $region22: #{dropout_entropy_detector_forward.1} parent=1 // pred_check
      _
    $region23: #{dropout_entropy_detector_forward.1} parent=1 // pred_check_branch
      %26 = sbr.rel (0) target = $region25
    $region24: #{dropout_entropy_detector_forward.1} parent=1 // pred_region
      %s28 = ssub.s32 8192, 8192
      %29 = vsyncadd [#allocation3], %s28
      %s30 = sshll.u32 [#allocation2], 4
      %s31 = int_to_ptr.vmem [resolvable:$true] %s30
      %36 = dma.hbm_to_vmem [thread:$0]  %s5, 8192, %s31, [#allocation3], 2048, 2048, 128
    $region25: #{dropout_entropy_detector_forward.1} parent=1 // pred_fallthru
      _
    // Predicated region
    $region26: #{dropout_entropy_detector_forward.1} parent=1 // pred_check
      _
    $region27: #{dropout_entropy_detector_forward.1} parent=1 // pred_check_branch
      %38 = sbr.rel (0) target = $region29
    $region28: #{dropout_entropy_detector_forward.1} parent=1 // pred_region
      %39 = dma.done [#allocation3], 8192
    $region29: #{dropout_entropy_detector_forward.1} parent=1 // pred_fallthru
      _
    %v40 = vld [vmem:[%s1] sm:$0xff]
    %v41 = vld [vmem:[%s1 + $0x8] sm:$0xff]
    %v42 = vld [vmem:[%s1 + $0x10] sm:$0xff]
    %v43 = vld [vmem:[%s1 + $0x18] sm:$0xff]
    %v44 = vld [vmem:[%s0] sm:$0xff]
    %v45 = vld [vmem:[%s2] sm:$0xff]
    %v46 = vld [vmem:[%s2 + $0x8] sm:$0xff]
    %v47 = vld [vmem:[%s2 + $0x10] sm:$0xff]
    %v48 = vld [vmem:[%s2 + $0x18] sm:$0xff]
    %50 = vset.pattern.permute.xlu0 0
    %51 = vperm.xlu0 %50, %v45
    %v52 = vpop.permute.xlu0 %51
    %55 = vset.pattern.permute.xlu0 0
    %56 = vperm.xlu0 %55, %v46
    %v57 = vpop.permute.xlu0 %56
    %60 = vset.pattern.permute.xlu0 0
    %61 = vperm.xlu0 %60, %v47
    %v62 = vpop.permute.xlu0 %61
    %65 = vset.pattern.permute.xlu0 0
    %66 = vperm.xlu0 %65, %v48
    %v67 = vpop.permute.xlu0 %66
    %v70 = vcombine.high %v44, %v44
    %vm71 = vcmask 31744
    %v73 = vsel %vm71, %v40, 0
    %v76 = vsel %vm71, %v41, 0
    %v79 = vsel %vm71, %v42, 0
    %v82 = vsel %vm71, %v43, 0
    %vm84 = vcmask 1043456
    %v85 = vsel %vm84, %v44, 0
    %v87 = vsel %vm84, %v70, 0
    %89 = vmatprep.subr.mxu0 %v87
    %90 = vmatpush1.msra.mxu0 %v85
    %91 = vmatprep.subr.mxu0 0.0
    %92 = vmatpush1.msra.mxu0 0.0
    %93 = vmatprep.subr.mxu0 0.0
    %94 = vmatpush1.msra.mxu0 0.0
    %95 = vmatprep.subr.mxu0 0.0
    %96 = vmatpush1.msra.mxu0 0.0
    %97 = vmatprep.subr.mxu0 0.0
    %98 = vmatpush1.msra.mxu0 0.0
    %99 = vmatprep.subr.mxu0 0.0
    %100 = vmatpush1.msra.mxu0 0.0
    %101 = vmatprep.subr.mxu0 0.0
    %102 = vmatpush1.msra.mxu0 0.0
    %103 = vmatprep.subr.mxu0 0.0
    %104 = vmatpush1.msra.mxu0 0.0
    %105 = vmatprep.subr.mxu0 0.0
    %106 = vmatpush1.msra.mxu0 0.0
    %107 = vmatprep.subr.mxu0 0.0
    %108 = vmatpush1.msra.mxu0 0.0
    %109 = vmatprep.subr.mxu0 0.0
    %110 = vmatpush1.msra.mxu0 0.0
    %111 = vmatprep.subr.mxu0 0.0
    %112 = vmatpush1.msra.mxu0 0.0
    %113 = vmatprep.subr.mxu0 0.0
    %114 = vmatpush1.msra.mxu0 0.0
    %115 = vmatprep.subr.mxu0 0.0
    %116 = vmatpush1.msra.mxu0 0.0
    %117 = vmatprep.subr.mxu0 0.0
    %118 = vmatpush1.msra.mxu0 0.0
    %119 = vmatprep.subr.mxu0 0.0
    %120 = vmatpush1.msra.mxu0 0.0
    %121 = vmatprep.subr.mxu0 0.0
    %122 = vmatpush1.msra.mxu0 0.0
    %123 = vmatprep.subr.mxu0 0.0
    %124 = vmatpush1.msra.mxu0 0.0
    %125 = vmatprep.subr.mxu0 0.0
    %126 = vmatpush1.msra.mxu0 0.0
    %127 = vmatprep.subr.mxu0 0.0
    %128 = vmatpush1.msra.mxu0 0.0
    %129 = vmatprep.subr.mxu0 0.0
    %130 = vmatpush1.msra.mxu0 0.0
    %131 = vmatprep.subr.mxu0 0.0
    %132 = vmatpush1.msra.mxu0 0.0
    %133 = vmatprep.subr.mxu0 0.0
    %134 = vmatpush1.msra.mxu0 0.0
    %135 = vmatprep.subr.mxu0 0.0
    %136 = vmatpush1.msra.mxu0 0.0
    %137 = vmatprep.subr.mxu0 0.0
    %138 = vmatpush1.msra.mxu0 0.0
    %139 = vmatprep.subr.mxu0 0.0
    %140 = vmatpush1.msra.mxu0 0.0
    %141 = vmatprep.subr.mxu0 0.0
    %142 = vmatpush1.msra.mxu0 0.0
    %143 = vmatprep.subr.mxu0 0.0
    %144 = vmatpush1.msra.mxu0 0.0
    %145 = vmatprep.subr.mxu0 0.0
    %146 = vmatpush1.msra.mxu0 0.0
    %147 = vmatprep.subr.mxu0 0.0
    %148 = vmatpush1.msra.mxu0 0.0
    %149 = vmatprep.subr.mxu0 0.0
    %150 = vmatpush1.msra.mxu0 0.0
    %151 = vmatprep.subr.mxu0 0.0
    %152 = vmatpush1.msra.mxu0 0.0
    %153 = vmatprep.mubr.f32.mxu0 0.0
    %154 = vmatmul.mubr.f32.gmra.mrb[0].mxu0 %v73
    %v155 = vpop.f32.mrb[0].mxu0
    %v156 = vadd.f32 %v52, %v155
    %v157 = vpop.f32.mrb[0].mxu0
    %v158 = vadd.f32 %v52, %v157
    %159 = vmatprep.mubr.f32.mxu0 0.0
    %160 = vmatmul.mubr.f32.gmra.mrb[0].mxu0 %v76
    %v161 = vpop.f32.mrb[0].mxu0
    %v162 = vadd.f32 %v57, %v161
    %v163 = vpop.f32.mrb[0].mxu0
    %v164 = vadd.f32 %v57, %v163
    %165 = vmatprep.mubr.f32.mxu0 0.0
    %166 = vmatmul.mubr.f32.gmra.mrb[0].mxu0 %v79
    %v167 = vpop.f32.mrb[0].mxu0
    %v168 = vadd.f32 %v62, %v167
    %v169 = vpop.f32.mrb[0].mxu0
    %v170 = vadd.f32 %v62, %v169
    %171 = vmatprep.mubr.f32.mxu0 0.0
    %172 = vmatmul.mubr.f32.gmra.mrb[0].mxu0 %v82
    %v173 = vpop.f32.mrb[0].mxu0
    %v174 = vadd.f32 %v67, %v173
    %v175 = vpop.f32.mrb[0].mxu0
    %v176 = vadd.f32 %v67, %v175
    %177 = vdwg.mxu0
    %v178 = vmax.f32 %v156, 0.0
    %v179 = vmax.f32 %v158, 0.0
    %v180 = vmax.f32 %v162, 0.0
    %v181 = vmax.f32 %v164, 0.0
    %v182 = vmax.f32 %v168, 0.0
    %v183 = vmax.f32 %v170, 0.0
    %v184 = vmax.f32 %v174, 0.0
    %v185 = vmax.f32 %v176, 0.0
    %v186 = vld [vmem:[%s3] sm:$0xf]
    %v187 = vld [vmem:[%s4] sm:$0xf]
    %189 = vset.pattern.permute.xlu0 0
    %190 = vperm.xlu0 %189, %v187
    %v191 = vpop.permute.xlu0 %190
    %vm193 = vcmask 261120
    %v195 = vsel %vm193, %v186, 0
    %197 = vmatprep.subr.mxu0 %v179
    %198 = vmatpush1.msra.mxu0 %v178
    %199 = vmatprep.subr.mxu0 %v181
    %200 = vmatpush1.msra.mxu0 %v180
    %201 = vmatprep.subr.mxu0 %v183
    %202 = vmatpush1.msra.mxu0 %v182
    %203 = vmatprep.subr.mxu0 %v185
    %204 = vmatpush1.msra.mxu0 %v184
    %205 = vmatprep.subr.mxu0 0.0
    %206 = vmatpush1.msra.mxu0 0.0
    %207 = vmatprep.subr.mxu0 0.0
    %208 = vmatpush1.msra.mxu0 0.0
    %209 = vmatprep.subr.mxu0 0.0
    %210 = vmatpush1.msra.mxu0 0.0
    %211 = vmatprep.subr.mxu0 0.0
    %212 = vmatpush1.msra.mxu0 0.0
    %213 = vmatprep.subr.mxu0 0.0
    %214 = vmatpush1.msra.mxu0 0.0
    %215 = vmatprep.subr.mxu0 0.0
    %216 = vmatpush1.msra.mxu0 0.0
    %217 = vmatprep.subr.mxu0 0.0
    %218 = vmatpush1.msra.mxu0 0.0
    %219 = vmatprep.subr.mxu0 0.0
    %220 = vmatpush1.msra.mxu0 0.0
    %221 = vmatprep.subr.mxu0 0.0
    %222 = vmatpush1.msra.mxu0 0.0
    %223 = vmatprep.subr.mxu0 0.0
    %224 = vmatpush1.msra.mxu0 0.0
    %225 = vmatprep.subr.mxu0 0.0
    %226 = vmatpush1.msra.mxu0 0.0
    %227 = vmatprep.subr.mxu0 0.0
    %228 = vmatpush1.msra.mxu0 0.0
    %229 = vmatprep.subr.mxu0 0.0
    %230 = vmatpush1.msra.mxu0 0.0
    %231 = vmatprep.subr.mxu0 0.0
    %232 = vmatpush1.msra.mxu0 0.0
    %233 = vmatprep.subr.mxu0 0.0
    %234 = vmatpush1.msra.mxu0 0.0
    %235 = vmatprep.subr.mxu0 0.0
    %236 = vmatpush1.msra.mxu0 0.0
    %237 = vmatprep.subr.mxu0 0.0
    %238 = vmatpush1.msra.mxu0 0.0
    %239 = vmatprep.subr.mxu0 0.0
    %240 = vmatpush1.msra.mxu0 0.0
    %241 = vmatprep.subr.mxu0 0.0
    %242 = vmatpush1.msra.mxu0 0.0
    %243 = vmatprep.subr.mxu0 0.0
    %244 = vmatpush1.msra.mxu0 0.0
    %245 = vmatprep.subr.mxu0 0.0
    %246 = vmatpush1.msra.mxu0 0.0
    %247 = vmatprep.subr.mxu0 0.0
    %248 = vmatpush1.msra.mxu0 0.0
    %249 = vmatprep.subr.mxu0 0.0
    %250 = vmatpush1.msra.mxu0 0.0
    %251 = vmatprep.subr.mxu0 0.0
    %252 = vmatpush1.msra.mxu0 0.0
    %253 = vmatprep.subr.mxu0 0.0
    %254 = vmatpush1.msra.mxu0 0.0
    %255 = vmatprep.subr.mxu0 0.0
    %256 = vmatpush1.msra.mxu0 0.0
    %257 = vmatprep.subr.mxu0 0.0
    %258 = vmatpush1.msra.mxu0 0.0
    %259 = vmatprep.subr.mxu0 0.0
    %260 = vmatpush1.msra.mxu0 0.0
    %261 = vmatprep.mubr.f32.mxu0 0.0
    %262 = vmatmul.mubr.f32.gmra.mrb[0].mxu0 %v195
    %v263 = vpop.f32.mrb[0].mxu0
    %v264 = vadd.f32 %v191, %v263
    %v265 = vpop.f32.mrb[0].mxu0
    %v266 = vadd.f32 %v191, %v265
    %267 = vdwg.mxu0
    %v270 = vcombine.low %v264, %v266
    %272 = vst [vmem:[%s7] sm:$0xff] %v270
    %v273 = vld [vmem:[#allocation2] sm:$0xff]
    %v274 = vld [vmem:[#allocation2 + $0x8] sm:$0xff]
    %v275 = vld [vmem:[#allocation2 + $0x10] sm:$0xff]
    %v276 = vld [vmem:[#allocation2 + $0x18] sm:$0xff]
    %v277 = vld [vmem:[#allocation2 + $0x20] sm:$0xff]
    %v278 = vld [vmem:[#allocation2 + $0x28] sm:$0xff]
    %v279 = vld [vmem:[#allocation2 + $0x30] sm:$0xff]
    %v280 = vld [vmem:[#allocation2 + $0x38] sm:$0xff]
    %v281 = vld [vmem:[#allocation2 + $0x40] sm:$0xff]
    %v282 = vld [vmem:[#allocation2 + $0x48] sm:$0xff]
    %v283 = vld [vmem:[#allocation2 + $0x50] sm:$0xff]
    %v284 = vld [vmem:[#allocation2 + $0x58] sm:$0xff]
    %v285 = vld [vmem:[#allocation2 + $0x60] sm:$0xff]
    %v286 = vld [vmem:[#allocation2 + $0x68] sm:$0xff]
    %v287 = vld [vmem:[#allocation2 + $0x70] sm:$0xff]
    %v288 = vld [vmem:[#allocation2 + $0x78] sm:$0xff]
    %v289 = vld [vmem:[#allocation2 + $0x80] sm:$0xff]
    %v290 = vld [vmem:[#allocation2 + $0x88] sm:$0xff]
    %v291 = vld [vmem:[#allocation2 + $0x90] sm:$0xff]
    %v292 = vld [vmem:[#allocation2 + $0x98] sm:$0xff]
    %v293 = vld [vmem:[#allocation2 + $0xa0] sm:$0xff]
    %v294 = vld [vmem:[#allocation2 + $0xa8] sm:$0xff]
    %v295 = vld [vmem:[#allocation2 + $0xb0] sm:$0xff]
    %v296 = vld [vmem:[#allocation2 + $0xb8] sm:$0xff]
    %v297 = vld [vmem:[#allocation2 + $0xc0] sm:$0xff]
    %v298 = vld [vmem:[#allocation2 + $0xc8] sm:$0xff]
    %v299 = vld [vmem:[#allocation2 + $0xd0] sm:$0xff]
    %v300 = vld [vmem:[#allocation2 + $0xd8] sm:$0xff]
    %v301 = vld [vmem:[#allocation2 + $0xe0] sm:$0xff]
    %v302 = vld [vmem:[#allocation2 + $0xe8] sm:$0xff]
    %v303 = vld [vmem:[#allocation2 + $0xf0] sm:$0xff]
    %v304 = vld [vmem:[#allocation2 + $0xf8] sm:$0xff]
    %v305 = vld [vmem:[#allocation2 + $0x100] sm:$0xff]
    %v306 = vld [vmem:[#allocation2 + $0x108] sm:$0xff]
    %v307 = vld [vmem:[#allocation2 + $0x110] sm:$0xff]
    %v308 = vld [vmem:[#allocation2 + $0x118] sm:$0xff]
    %v309 = vld [vmem:[#allocation2 + $0x120] sm:$0xff]
    %v310 = vld [vmem:[#allocation2 + $0x128] sm:$0xff]
    %v311 = vld [vmem:[#allocation2 + $0x130] sm:$0xff]
    %v312 = vld [vmem:[#allocation2 + $0x138] sm:$0xff]
    %v313 = vld [vmem:[#allocation2 + $0x140] sm:$0xff]
    %v314 = vld [vmem:[#allocation2 + $0x148] sm:$0xff]
    %v315 = vld [vmem:[#allocation2 + $0x150] sm:$0xff]
    %v316 = vld [vmem:[#allocation2 + $0x158] sm:$0xff]
    %v317 = vld [vmem:[#allocation2 + $0x160] sm:$0xff]
    %v318 = vld [vmem:[#allocation2 + $0x168] sm:$0xff]
    %v319 = vld [vmem:[#allocation2 + $0x170] sm:$0xff]
    %v320 = vld [vmem:[#allocation2 + $0x178] sm:$0xff]
    %v321 = vld [vmem:[#allocation2 + $0x180] sm:$0xff]
    %v322 = vld [vmem:[#allocation2 + $0x188] sm:$0xff]
    %v323 = vld [vmem:[#allocation2 + $0x190] sm:$0xff]
    %v324 = vld [vmem:[#allocation2 + $0x198] sm:$0xff]
    %v325 = vld [vmem:[#allocation2 + $0x1a0] sm:$0xff]
    %v326 = vld [vmem:[#allocation2 + $0x1a8] sm:$0xff]
    %v327 = vld [vmem:[#allocation2 + $0x1b0] sm:$0xff]
    %v328 = vld [vmem:[#allocation2 + $0x1b8] sm:$0xff]
    %v329 = vld [vmem:[#allocation2 + $0x1c0] sm:$0xff]
    %v330 = vld [vmem:[#allocation2 + $0x1c8] sm:$0xff]
    %v331 = vld [vmem:[#allocation2 + $0x1d0] sm:$0xff]
    %v332 = vld [vmem:[#allocation2 + $0x1d8] sm:$0xff]
    %v333 = vld [vmem:[#allocation2 + $0x1e0] sm:$0xff]
    %v334 = vld [vmem:[#allocation2 + $0x1e8] sm:$0xff]
    %v335 = vld [vmem:[#allocation2 + $0x1f0] sm:$0xff]
    %v336 = vld [vmem:[#allocation2 + $0x1f8] sm:$0xff]
    %vm337 = vcmp.ge.s32.totalorder %v273, 2097152
    %vm338 = vcmp.ge.s32.totalorder %v274, 2097152
    %vm339 = vcmp.ge.s32.totalorder %v275, 2097152
    %vm340 = vcmp.ge.s32.totalorder %v276, 2097152
    %vm341 = vcmp.ge.s32.totalorder %v277, 2097152
    %vm342 = vcmp.ge.s32.totalorder %v278, 2097152
    %vm343 = vcmp.ge.s32.totalorder %v279, 2097152
    %vm344 = vcmp.ge.s32.totalorder %v280, 2097152
    %vm345 = vcmp.ge.s32.totalorder %v281, 2097152
    %vm346 = vcmp.ge.s32.totalorder %v282, 2097152
    %vm347 = vcmp.ge.s32.totalorder %v283, 2097152
    %vm348 = vcmp.ge.s32.totalorder %v284, 2097152
    %vm349 = vcmp.ge.s32.totalorder %v285, 2097152
    %vm350 = vcmp.ge.s32.totalorder %v286, 2097152
    %vm351 = vcmp.ge.s32.totalorder %v287, 2097152
    %vm352 = vcmp.ge.s32.totalorder %v288, 2097152
    %vm353 = vcmp.ge.s32.totalorder %v289, 2097152
    %vm354 = vcmp.ge.s32.totalorder %v290, 2097152
    %vm355 = vcmp.ge.s32.totalorder %v291, 2097152
    %vm356 = vcmp.ge.s32.totalorder %v292, 2097152
    %vm357 = vcmp.ge.s32.totalorder %v293, 2097152
    %vm358 = vcmp.ge.s32.totalorder %v294, 2097152
    %vm359 = vcmp.ge.s32.totalorder %v295, 2097152
    %vm360 = vcmp.ge.s32.totalorder %v296, 2097152
    %vm361 = vcmp.ge.s32.totalorder %v297, 2097152
    %vm362 = vcmp.ge.s32.totalorder %v298, 2097152
    %vm363 = vcmp.ge.s32.totalorder %v299, 2097152
    %vm364 = vcmp.ge.s32.totalorder %v300, 2097152
    %vm365 = vcmp.ge.s32.totalorder %v301, 2097152
    %vm366 = vcmp.ge.s32.totalorder %v302, 2097152
    %vm367 = vcmp.ge.s32.totalorder %v303, 2097152
    %vm368 = vcmp.ge.s32.totalorder %v304, 2097152
    %vm369 = vcmp.ge.s32.totalorder %v305, 2097152
    %vm370 = vcmp.ge.s32.totalorder %v306, 2097152
    %vm371 = vcmp.ge.s32.totalorder %v307, 2097152
    %vm372 = vcmp.ge.s32.totalorder %v308, 2097152
    %vm373 = vcmp.ge.s32.totalorder %v309, 2097152
    %vm374 = vcmp.ge.s32.totalorder %v310, 2097152
    %vm375 = vcmp.ge.s32.totalorder %v311, 2097152
    %vm376 = vcmp.ge.s32.totalorder %v312, 2097152
    %vm377 = vcmp.ge.s32.totalorder %v313, 2097152
    %vm378 = vcmp.ge.s32.totalorder %v314, 2097152
    %vm379 = vcmp.ge.s32.totalorder %v315, 2097152
    %vm380 = vcmp.ge.s32.totalorder %v316, 2097152
    %vm381 = vcmp.ge.s32.totalorder %v317, 2097152
    %vm382 = vcmp.ge.s32.totalorder %v318, 2097152
    %vm383 = vcmp.ge.s32.totalorder %v319, 2097152
    %vm384 = vcmp.ge.s32.totalorder %v320, 2097152
    %vm385 = vcmp.ge.s32.totalorder %v321, 2097152
    %vm386 = vcmp.ge.s32.totalorder %v322, 2097152
    %vm387 = vcmp.ge.s32.totalorder %v323, 2097152
    %vm388 = vcmp.ge.s32.totalorder %v324, 2097152
    %vm389 = vcmp.ge.s32.totalorder %v325, 2097152
    %vm390 = vcmp.ge.s32.totalorder %v326, 2097152
    %vm391 = vcmp.ge.s32.totalorder %v327, 2097152
    %vm392 = vcmp.ge.s32.totalorder %v328, 2097152
    %vm393 = vcmp.ge.s32.totalorder %v329, 2097152
    %vm394 = vcmp.ge.s32.totalorder %v330, 2097152
    %vm395 = vcmp.ge.s32.totalorder %v331, 2097152
    %vm396 = vcmp.ge.s32.totalorder %v332, 2097152
    %vm397 = vcmp.ge.s32.totalorder %v333, 2097152
    %vm398 = vcmp.ge.s32.totalorder %v334, 2097152
    %vm399 = vcmp.ge.s32.totalorder %v335, 2097152
    %vm400 = vcmp.ge.s32.totalorder %v336, 2097152
    %v401 = vmul.f32 %v178, 1.3333334
    %v402 = vmul.f32 %v179, 1.3333334
    %v403 = vmul.f32 %v180, 1.3333334
    %v404 = vmul.f32 %v181, 1.3333334
    %v405 = vmul.f32 %v182, 1.3333334
    %v406 = vmul.f32 %v183, 1.3333334
    %v407 = vmul.f32 %v184, 1.3333334
    %v408 = vmul.f32 %v185, 1.3333334
    %v409 = vsel %vm337, %v401, 0.0
    %v410 = vsel %vm338, %v402, 0.0
    %v411 = vsel %vm339, %v401, 0.0
    %v412 = vsel %vm340, %v402, 0.0
    %v413 = vsel %vm341, %v401, 0.0
    %v414 = vsel %vm342, %v402, 0.0
    %v415 = vsel %vm343, %v401, 0.0
    %v416 = vsel %vm344, %v402, 0.0
    %v417 = vsel %vm345, %v401, 0.0
    %v418 = vsel %vm346, %v402, 0.0
    %v419 = vsel %vm347, %v401, 0.0
    %v420 = vsel %vm348, %v402, 0.0
    %v421 = vsel %vm349, %v401, 0.0
    %v422 = vsel %vm350, %v402, 0.0
    %v423 = vsel %vm351, %v401, 0.0
    %v424 = vsel %vm352, %v402, 0.0
    %v425 = vsel %vm353, %v403, 0.0
    %v426 = vsel %vm354, %v404, 0.0
    %v427 = vsel %vm355, %v403, 0.0
    %v428 = vsel %vm356, %v404, 0.0
    %v429 = vsel %vm357, %v403, 0.0
    %v430 = vsel %vm358, %v404, 0.0
    %v431 = vsel %vm359, %v403, 0.0
    %v432 = vsel %vm360, %v404, 0.0
    %v433 = vsel %vm361, %v403, 0.0
    %v434 = vsel %vm362, %v404, 0.0
    %v435 = vsel %vm363, %v403, 0.0
    %v436 = vsel %vm364, %v404, 0.0
    %v437 = vsel %vm365, %v403, 0.0
    %v438 = vsel %vm366, %v404, 0.0
    %v439 = vsel %vm367, %v403, 0.0
    %v440 = vsel %vm368, %v404, 0.0
    %v441 = vsel %vm369, %v405, 0.0
    %v442 = vsel %vm370, %v406, 0.0
    %v443 = vsel %vm371, %v405, 0.0
    %v444 = vsel %vm372, %v406, 0.0
    %v445 = vsel %vm373, %v405, 0.0
    %v446 = vsel %vm374, %v406, 0.0
    %v447 = vsel %vm375, %v405, 0.0
    %v448 = vsel %vm376, %v406, 0.0
    %v449 = vsel %vm377, %v405, 0.0
    %v450 = vsel %vm378, %v406, 0.0
    %v451 = vsel %vm379, %v405, 0.0
    %v452 = vsel %vm380, %v406, 0.0
    %v453 = vsel %vm381, %v405, 0.0
    %v454 = vsel %vm382, %v406, 0.0
    %v455 = vsel %vm383, %v405, 0.0
    %v456 = vsel %vm384, %v406, 0.0
    %v457 = vsel %vm385, %v407, 0.0
    %v458 = vsel %vm386, %v408, 0.0
    %v459 = vsel %vm387, %v407, 0.0
    %v460 = vsel %vm388, %v408, 0.0
    %v461 = vsel %vm389, %v407, 0.0
    %v462 = vsel %vm390, %v408, 0.0
    %v463 = vsel %vm391, %v407, 0.0
    %v464 = vsel %vm392, %v408, 0.0
    %v465 = vsel %vm393, %v407, 0.0
    %v466 = vsel %vm394, %v408, 0.0
    %v467 = vsel %vm395, %v407, 0.0
    %v468 = vsel %vm396, %v408, 0.0
    %v469 = vsel %vm397, %v407, 0.0
    %v470 = vsel %vm398, %v408, 0.0
    %v471 = vsel %vm399, %v407, 0.0
    %v472 = vsel %vm400, %v408, 0.0
    %v473 = vld [vmem:[%s3] sm:$0xf]
    %v474 = vld [vmem:[%s4] sm:$0xf]
    %476 = vset.pattern.permute.xlu0 0
    %477 = vperm.xlu0 %476, %v474
    %v478 = vpop.permute.xlu0 %477
    %v481 = vsel %vm193, %v473, 0
    %483 = vmatprep.subr.mxu0 %v410
    %484 = vmatpush1.msra.mxu0 %v409
    %485 = vmatprep.subr.mxu0 %v426
    %486 = vmatpush1.msra.mxu0 %v425
    %487 = vmatprep.subr.mxu0 %v442
    %488 = vmatpush1.msra.mxu0 %v441
    %489 = vmatprep.subr.mxu0 %v458
    %490 = vmatpush1.msra.mxu0 %v457
    %491 = vmatprep.subr.mxu0 0.0
    %492 = vmatpush1.msra.mxu0 0.0
    %493 = vmatprep.subr.mxu0 0.0
    %494 = vmatpush1.msra.mxu0 0.0
    %495 = vmatprep.subr.mxu0 0.0
    %496 = vmatpush1.msra.mxu0 0.0
    %497 = vmatprep.subr.mxu0 0.0
    %498 = vmatpush1.msra.mxu0 0.0
    %499 = vmatprep.subr.mxu0 0.0
    %500 = vmatpush1.msra.mxu0 0.0
    %501 = vmatprep.subr.mxu0 0.0
    %502 = vmatpush1.msra.mxu0 0.0
    %503 = vmatprep.subr.mxu0 0.0
    %504 = vmatpush1.msra.mxu0 0.0
    %505 = vmatprep.subr.mxu0 0.0
    %506 = vmatpush1.msra.mxu0 0.0
    %507 = vmatprep.subr.mxu0 0.0
    %508 = vmatpush1.msra.mxu0 0.0
    %509 = vmatprep.subr.mxu0 0.0
    %510 = vmatpush1.msra.mxu0 0.0
    %511 = vmatprep.subr.mxu0 0.0
    %512 = vmatpush1.msra.mxu0 0.0
    %513 = vmatprep.subr.mxu0 0.0
    %514 = vmatpush1.msra.mxu0 0.0
    %515 = vmatprep.subr.mxu0 0.0
    %516 = vmatpush1.msra.mxu0 0.0
    %517 = vmatprep.subr.mxu0 0.0
    %518 = vmatpush1.msra.mxu0 0.0
    %519 = vmatprep.subr.mxu0 0.0
    %520 = vmatpush1.msra.mxu0 0.0
    %521 = vmatprep.subr.mxu0 0.0
    %522 = vmatpush1.msra.mxu0 0.0
    %523 = vmatprep.subr.mxu0 0.0
    %524 = vmatpush1.msra.mxu0 0.0
    %525 = vmatprep.subr.mxu0 0.0
    %526 = vmatpush1.msra.mxu0 0.0
    %527 = vmatprep.subr.mxu0 0.0
    %528 = vmatpush1.msra.mxu0 0.0
    %529 = vmatprep.subr.mxu0 0.0
    %530 = vmatpush1.msra.mxu0 0.0
    %531 = vmatprep.subr.mxu0 0.0
    %532 = vmatpush1.msra.mxu0 0.0
    %533 = vmatprep.subr.mxu0 0.0
    %534 = vmatpush1.msra.mxu0 0.0
    %535 = vmatprep.subr.mxu0 0.0
    %536 = vmatpush1.msra.mxu0 0.0
    %537 = vmatprep.subr.mxu0 0.0
    %538 = vmatpush1.msra.mxu0 0.0
    %539 = vmatprep.subr.mxu0 0.0
    %540 = vmatpush1.msra.mxu0 0.0
    %541 = vmatprep.subr.mxu0 0.0
    %542 = vmatpush1.msra.mxu0 0.0
    %543 = vmatprep.subr.mxu0 0.0
    %544 = vmatpush1.msra.mxu0 0.0
    %545 = vmatprep.subr.mxu0 0.0
    %546 = vmatpush1.msra.mxu0 0.0
    %547 = vmatprep.mubr.f32.mxu0 0.0
    %548 = vmatmul.mubr.f32.gmra.mrb[0].mxu0 %v481
    %v549 = vpop.f32.mrb[0].mxu0
    %v550 = vadd.f32 %v478, %v549
    %v551 = vpop.f32.mrb[0].mxu0
    %v552 = vadd.f32 %v478, %v551
    %553 = vdwg.mxu0
    %554 = vmatprep.subr.mxu0 %v412
    %555 = vmatpush1.msra.mxu0 %v411
    %556 = vmatprep.subr.mxu0 %v428
    %557 = vmatpush1.msra.mxu0 %v427
    %558 = vmatprep.subr.mxu0 %v444
    %559 = vmatpush1.msra.mxu0 %v443
    %560 = vmatprep.subr.mxu0 %v460
    %561 = vmatpush1.msra.mxu0 %v459
    %562 = vmatprep.subr.mxu0 0.0
    %563 = vmatpush1.msra.mxu0 0.0
    %564 = vmatprep.subr.mxu0 0.0
    %565 = vmatpush1.msra.mxu0 0.0
    %566 = vmatprep.subr.mxu0 0.0
    %567 = vmatpush1.msra.mxu0 0.0
    %568 = vmatprep.subr.mxu0 0.0
    %569 = vmatpush1.msra.mxu0 0.0
    %570 = vmatprep.subr.mxu0 0.0
    %571 = vmatpush1.msra.mxu0 0.0
    %572 = vmatprep.subr.mxu0 0.0
    %573 = vmatpush1.msra.mxu0 0.0
    %574 = vmatprep.subr.mxu0 0.0
    %575 = vmatpush1.msra.mxu0 0.0
    %576 = vmatprep.subr.mxu0 0.0
    %577 = vmatpush1.msra.mxu0 0.0
    %578 = vmatprep.subr.mxu0 0.0
    %579 = vmatpush1.msra.mxu0 0.0
    %580 = vmatprep.subr.mxu0 0.0
    %581 = vmatpush1.msra.mxu0 0.0
    %582 = vmatprep.subr.mxu0 0.0
    %583 = vmatpush1.msra.mxu0 0.0
    %584 = vmatprep.subr.mxu0 0.0
    %585 = vmatpush1.msra.mxu0 0.0
    %586 = vmatprep.subr.mxu0 0.0
    %587 = vmatpush1.msra.mxu0 0.0
    %588 = vmatprep.subr.mxu0 0.0
    %589 = vmatpush1.msra.mxu0 0.0
    %590 = vmatprep.subr.mxu0 0.0
    %591 = vmatpush1.msra.mxu0 0.0
    %592 = vmatprep.subr.mxu0 0.0
    %593 = vmatpush1.msra.mxu0 0.0
    %594 = vmatprep.subr.mxu0 0.0
    %595 = vmatpush1.msra.mxu0 0.0
    %596 = vmatprep.subr.mxu0 0.0
    %597 = vmatpush1.msra.mxu0 0.0
    %598 = vmatprep.subr.mxu0 0.0
    %599 = vmatpush1.msra.mxu0 0.0
    %600 = vmatprep.subr.mxu0 0.0
    %601 = vmatpush1.msra.mxu0 0.0
    %602 = vmatprep.subr.mxu0 0.0
    %603 = vmatpush1.msra.mxu0 0.0
    %604 = vmatprep.subr.mxu0 0.0
    %605 = vmatpush1.msra.mxu0 0.0
    %606 = vmatprep.subr.mxu0 0.0
    %607 = vmatpush1.msra.mxu0 0.0
    %608 = vmatprep.subr.mxu0 0.0
    %609 = vmatpush1.msra.mxu0 0.0
    %610 = vmatprep.subr.mxu0 0.0
    %611 = vmatpush1.msra.mxu0 0.0
    %612 = vmatprep.subr.mxu0 0.0
    %613 = vmatpush1.msra.mxu0 0.0
    %614 = vmatprep.subr.mxu0 0.0
    %615 = vmatpush1.msra.mxu0 0.0
    %616 = vmatprep.subr.mxu0 0.0
    %617 = vmatpush1.msra.mxu0 0.0
    %618 = vmatprep.mubr.f32.mxu0 0.0
    %619 = vmatmul.mubr.f32.gmra.mrb[0].mxu0 %v481
    %v620 = vpop.f32.mrb[0].mxu0
    %v621 = vadd.f32 %v478, %v620
    %v622 = vpop.f32.mrb[0].mxu0
    %v623 = vadd.f32 %v478, %v622
    %624 = vdwg.mxu0
    %625 = vmatprep.subr.mxu0 %v414
    %626 = vmatpush1.msra.mxu0 %v413
    %627 = vmatprep.subr.mxu0 %v430
    %628 = vmatpush1.msra.mxu0 %v429
    %629 = vmatprep.subr.mxu0 %v446
    %630 = vmatpush1.msra.mxu0 %v445
    %631 = vmatprep.subr.mxu0 %v462
    %632 = vmatpush1.msra.mxu0 %v461
    %633 = vmatprep.subr.mxu0 0.0
    %634 = vmatpush1.msra.mxu0 0.0
    %635 = vmatprep.subr.mxu0 0.0
    %636 = vmatpush1.msra.mxu0 0.0
    %637 = vmatprep.subr.mxu0 0.0
    %638 = vmatpush1.msra.mxu0 0.0
    %639 = vmatprep.subr.mxu0 0.0
    %640 = vmatpush1.msra.mxu0 0.0
    %641 = vmatprep.subr.mxu0 0.0
    %642 = vmatpush1.msra.mxu0 0.0
    %643 = vmatprep.subr.mxu0 0.0
    %644 = vmatpush1.msra.mxu0 0.0
    %645 = vmatprep.subr.mxu0 0.0
    %646 = vmatpush1.msra.mxu0 0.0
    %647 = vmatprep.subr.mxu0 0.0
    %648 = vmatpush1.msra.mxu0 0.0
    %649 = vmatprep.subr.mxu0 0.0
    %650 = vmatpush1.msra.mxu0 0.0
    %651 = vmatprep.subr.mxu0 0.0
    %652 = vmatpush1.msra.mxu0 0.0
    %653 = vmatprep.subr.mxu0 0.0
    %654 = vmatpush1.msra.mxu0 0.0
    %655 = vmatprep.subr.mxu0 0.0
    %656 = vmatpush1.msra.mxu0 0.0
    %657 = vmatprep.subr.mxu0 0.0
    %658 = vmatpush1.msra.mxu0 0.0
    %659 = vmatprep.subr.mxu0 0.0
    %660 = vmatpush1.msra.mxu0 0.0
    %661 = vmatprep.subr.mxu0 0.0
    %662 = vmatpush1.msra.mxu0 0.0
    %663 = vmatprep.subr.mxu0 0.0
    %664 = vmatpush1.msra.mxu0 0.0
    %665 = vmatprep.subr.mxu0 0.0
    %666 = vmatpush1.msra.mxu0 0.0
    %667 = vmatprep.subr.mxu0 0.0
    %668 = vmatpush1.msra.mxu0 0.0
    %669 = vmatprep.subr.mxu0 0.0
    %670 = vmatpush1.msra.mxu0 0.0
    %671 = vmatprep.subr.mxu0 0.0
    %672 = vmatpush1.msra.mxu0 0.0
    %673 = vmatprep.subr.mxu0 0.0
    %674 = vmatpush1.msra.mxu0 0.0
    %675 = vmatprep.subr.mxu0 0.0
    %676 = vmatpush1.msra.mxu0 0.0
    %677 = vmatprep.subr.mxu0 0.0
    %678 = vmatpush1.msra.mxu0 0.0
    %679 = vmatprep.subr.mxu0 0.0
    %680 = vmatpush1.msra.mxu0 0.0
    %681 = vmatprep.subr.mxu0 0.0
    %682 = vmatpush1.msra.mxu0 0.0
    %683 = vmatprep.subr.mxu0 0.0
    %684 = vmatpush1.msra.mxu0 0.0
    %685 = vmatprep.subr.mxu0 0.0
    %686 = vmatpush1.msra.mxu0 0.0
    %687 = vmatprep.subr.mxu0 0.0
    %688 = vmatpush1.msra.mxu0 0.0
    %689 = vmatprep.mubr.f32.mxu0 0.0
    %690 = vmatmul.mubr.f32.gmra.mrb[0].mxu0 %v481
    %v691 = vpop.f32.mrb[0].mxu0
    %v692 = vadd.f32 %v478, %v691
    %v693 = vpop.f32.mrb[0].mxu0
    %v694 = vadd.f32 %v478, %v693
    %695 = vdwg.mxu0
    %696 = vmatprep.subr.mxu0 %v416
    %697 = vmatpush1.msra.mxu0 %v415
    %698 = vmatprep.subr.mxu0 %v432
    %699 = vmatpush1.msra.mxu0 %v431
    %700 = vmatprep.subr.mxu0 %v448
    %701 = vmatpush1.msra.mxu0 %v447
    %702 = vmatprep.subr.mxu0 %v464
    %703 = vmatpush1.msra.mxu0 %v463
    %704 = vmatprep.subr.mxu0 0.0
    %705 = vmatpush1.msra.mxu0 0.0
    %706 = vmatprep.subr.mxu0 0.0
    %707 = vmatpush1.msra.mxu0 0.0
    %708 = vmatprep.subr.mxu0 0.0
    %709 = vmatpush1.msra.mxu0 0.0
    %710 = vmatprep.subr.mxu0 0.0
    %711 = vmatpush1.msra.mxu0 0.0
    %712 = vmatprep.subr.mxu0 0.0
    %713 = vmatpush1.msra.mxu0 0.0
    %714 = vmatprep.subr.mxu0 0.0
    %715 = vmatpush1.msra.mxu0 0.0
    %716 = vmatprep.subr.mxu0 0.0
    %717 = vmatpush1.msra.mxu0 0.0
    %718 = vmatprep.subr.mxu0 0.0
    %719 = vmatpush1.msra.mxu0 0.0
    %720 = vmatprep.subr.mxu0 0.0
    %721 = vmatpush1.msra.mxu0 0.0
    %722 = vmatprep.subr.mxu0 0.0
    %723 = vmatpush1.msra.mxu0 0.0
    %724 = vmatprep.subr.mxu0 0.0
    %725 = vmatpush1.msra.mxu0 0.0
    %726 = vmatprep.subr.mxu0 0.0
    %727 = vmatpush1.msra.mxu0 0.0
    %728 = vmatprep.subr.mxu0 0.0
    %729 = vmatpush1.msra.mxu0 0.0
    %730 = vmatprep.subr.mxu0 0.0
    %731 = vmatpush1.msra.mxu0 0.0
    %732 = vmatprep.subr.mxu0 0.0
    %733 = vmatpush1.msra.mxu0 0.0
    %734 = vmatprep.subr.mxu0 0.0
    %735 = vmatpush1.msra.mxu0 0.0
    %736 = vmatprep.subr.mxu0 0.0
    %737 = vmatpush1.msra.mxu0 0.0
    %738 = vmatprep.subr.mxu0 0.0
    %739 = vmatpush1.msra.mxu0 0.0
    %740 = vmatprep.subr.mxu0 0.0
    %741 = vmatpush1.msra.mxu0 0.0
    %742 = vmatprep.subr.mxu0 0.0
    %743 = vmatpush1.msra.mxu0 0.0
    %744 = vmatprep.subr.mxu0 0.0
    %745 = vmatpush1.msra.mxu0 0.0
    %746 = vmatprep.subr.mxu0 0.0
    %747 = vmatpush1.msra.mxu0 0.0
    %748 = vmatprep.subr.mxu0 0.0
    %749 = vmatpush1.msra.mxu0 0.0
    %750 = vmatprep.subr.mxu0 0.0
    %751 = vmatpush1.msra.mxu0 0.0
    %752 = vmatprep.subr.mxu0 0.0
    %753 = vmatpush1.msra.mxu0 0.0
    %754 = vmatprep.subr.mxu0 0.0
    %755 = vmatpush1.msra.mxu0 0.0
    %756 = vmatprep.subr.mxu0 0.0
    %757 = vmatpush1.msra.mxu0 0.0
    %758 = vmatprep.subr.mxu0 0.0
    %759 = vmatpush1.msra.mxu0 0.0
    %760 = vmatprep.mubr.f32.mxu0 0.0
    %761 = vmatmul.mubr.f32.gmra.mrb[0].mxu0 %v481
    %v762 = vpop.f32.mrb[0].mxu0
    %v763 = vadd.f32 %v478, %v762
    %v764 = vpop.f32.mrb[0].mxu0
    %v765 = vadd.f32 %v478, %v764
    %766 = vdwg.mxu0
    %767 = vmatprep.subr.mxu0 %v418
    %768 = vmatpush1.msra.mxu0 %v417
    %769 = vmatprep.subr.mxu0 %v434
    %770 = vmatpush1.msra.mxu0 %v433
    %771 = vmatprep.subr.mxu0 %v450
    %772 = vmatpush1.msra.mxu0 %v449
    %773 = vmatprep.subr.mxu0 %v466
    %774 = vmatpush1.msra.mxu0 %v465
    %775 = vmatprep.subr.mxu0 0.0
    %776 = vmatpush1.msra.mxu0 0.0
    %777 = vmatprep.subr.mxu0 0.0
    %778 = vmatpush1.msra.mxu0 0.0
    %779 = vmatprep.subr.mxu0 0.0
    %780 = vmatpush1.msra.mxu0 0.0
    %781 = vmatprep.subr.mxu0 0.0
    %782 = vmatpush1.msra.mxu0 0.0
    %783 = vmatprep.subr.mxu0 0.0
    %784 = vmatpush1.msra.mxu0 0.0
    %785 = vmatprep.subr.mxu0 0.0
    %786 = vmatpush1.msra.mxu0 0.0
    %787 = vmatprep.subr.mxu0 0.0
    %788 = vmatpush1.msra.mxu0 0.0
    %789 = vmatprep.subr.mxu0 0.0
    %790 = vmatpush1.msra.mxu0 0.0
    %791 = vmatprep.subr.mxu0 0.0
    %792 = vmatpush1.msra.mxu0 0.0
    %793 = vmatprep.subr.mxu0 0.0
    %794 = vmatpush1.msra.mxu0 0.0
    %795 = vmatprep.subr.mxu0 0.0
    %796 = vmatpush1.msra.mxu0 0.0
    %797 = vmatprep.subr.mxu0 0.0
    %798 = vmatpush1.msra.mxu0 0.0
    %799 = vmatprep.subr.mxu0 0.0
    %800 = vmatpush1.msra.mxu0 0.0
    %801 = vmatprep.subr.mxu0 0.0
    %802 = vmatpush1.msra.mxu0 0.0
    %803 = vmatprep.subr.mxu0 0.0
    %804 = vmatpush1.msra.mxu0 0.0
    %805 = vmatprep.subr.mxu0 0.0
    %806 = vmatpush1.msra.mxu0 0.0
    %807 = vmatprep.subr.mxu0 0.0
    %808 = vmatpush1.msra.mxu0 0.0
    %809 = vmatprep.subr.mxu0 0.0
    %810 = vmatpush1.msra.mxu0 0.0
    %811 = vmatprep.subr.mxu0 0.0
    %812 = vmatpush1.msra.mxu0 0.0
    %813 = vmatprep.subr.mxu0 0.0
    %814 = vmatpush1.msra.mxu0 0.0
    %815 = vmatprep.subr.mxu0 0.0
    %816 = vmatpush1.msra.mxu0 0.0
    %817 = vmatprep.subr.mxu0 0.0
    %818 = vmatpush1.msra.mxu0 0.0
    %819 = vmatprep.subr.mxu0 0.0
    %820 = vmatpush1.msra.mxu0 0.0
    %821 = vmatprep.subr.mxu0 0.0
    %822 = vmatpush1.msra.mxu0 0.0
    %823 = vmatprep.subr.mxu0 0.0
    %824 = vmatpush1.msra.mxu0 0.0
    %825 = vmatprep.subr.mxu0 0.0
    %826 = vmatpush1.msra.mxu0 0.0
    %827 = vmatprep.subr.mxu0 0.0
    %828 = vmatpush1.msra.mxu0 0.0
    %829 = vmatprep.subr.mxu0 0.0
    %830 = vmatpush1.msra.mxu0 0.0
    %831 = vmatprep.mubr.f32.mxu0 0.0
    %832 = vmatmul.mubr.f32.gmra.mrb[0].mxu0 %v481
    %v833 = vpop.f32.mrb[0].mxu0
    %v834 = vadd.f32 %v478, %v833
    %v835 = vpop.f32.mrb[0].mxu0
    %v836 = vadd.f32 %v478, %v835
    %837 = vdwg.mxu0
    %838 = vmatprep.subr.mxu0 %v420
    %839 = vmatpush1.msra.mxu0 %v419
    %840 = vmatprep.subr.mxu0 %v436
    %841 = vmatpush1.msra.mxu0 %v435
    %842 = vmatprep.subr.mxu0 %v452
    %843 = vmatpush1.msra.mxu0 %v451
    %844 = vmatprep.subr.mxu0 %v468
    %845 = vmatpush1.msra.mxu0 %v467
    %846 = vmatprep.subr.mxu0 0.0
    %847 = vmatpush1.msra.mxu0 0.0
    %848 = vmatprep.subr.mxu0 0.0
    %849 = vmatpush1.msra.mxu0 0.0
    %850 = vmatprep.subr.mxu0 0.0
    %851 = vmatpush1.msra.mxu0 0.0
    %852 = vmatprep.subr.mxu0 0.0
    %853 = vmatpush1.msra.mxu0 0.0
    %854 = vmatprep.subr.mxu0 0.0
    %855 = vmatpush1.msra.mxu0 0.0
    %856 = vmatprep.subr.mxu0 0.0
    %857 = vmatpush1.msra.mxu0 0.0
    %858 = vmatprep.subr.mxu0 0.0
    %859 = vmatpush1.msra.mxu0 0.0
    %860 = vmatprep.subr.mxu0 0.0
    %861 = vmatpush1.msra.mxu0 0.0
    %862 = vmatprep.subr.mxu0 0.0
    %863 = vmatpush1.msra.mxu0 0.0
    %864 = vmatprep.subr.mxu0 0.0
    %865 = vmatpush1.msra.mxu0 0.0
    %866 = vmatprep.subr.mxu0 0.0
    %867 = vmatpush1.msra.mxu0 0.0
    %868 = vmatprep.subr.mxu0 0.0
    %869 = vmatpush1.msra.mxu0 0.0
    %870 = vmatprep.subr.mxu0 0.0
    %871 = vmatpush1.msra.mxu0 0.0
    %872 = vmatprep.subr.mxu0 0.0
    %873 = vmatpush1.msra.mxu0 0.0
    %874 = vmatprep.subr.mxu0 0.0
    %875 = vmatpush1.msra.mxu0 0.0
    %876 = vmatprep.subr.mxu0 0.0
    %877 = vmatpush1.msra.mxu0 0.0
    %878 = vmatprep.subr.mxu0 0.0
    %879 = vmatpush1.msra.mxu0 0.0
    %880 = vmatprep.subr.mxu0 0.0
    %881 = vmatpush1.msra.mxu0 0.0
    %882 = vmatprep.subr.mxu0 0.0
    %883 = vmatpush1.msra.mxu0 0.0
    %884 = vmatprep.subr.mxu0 0.0
    %885 = vmatpush1.msra.mxu0 0.0
    %886 = vmatprep.subr.mxu0 0.0
    %887 = vmatpush1.msra.mxu0 0.0
    %888 = vmatprep.subr.mxu0 0.0
    %889 = vmatpush1.msra.mxu0 0.0
    %890 = vmatprep.subr.mxu0 0.0
    %891 = vmatpush1.msra.mxu0 0.0
    %892 = vmatprep.subr.mxu0 0.0
    %893 = vmatpush1.msra.mxu0 0.0
    %894 = vmatprep.subr.mxu0 0.0
    %895 = vmatpush1.msra.mxu0 0.0
    %896 = vmatprep.subr.mxu0 0.0
    %897 = vmatpush1.msra.mxu0 0.0
    %898 = vmatprep.subr.mxu0 0.0
    %899 = vmatpush1.msra.mxu0 0.0
    %900 = vmatprep.subr.mxu0 0.0
    %901 = vmatpush1.msra.mxu0 0.0
    %902 = vmatprep.mubr.f32.mxu0 0.0
    %903 = vmatmul.mubr.f32.gmra.mrb[0].mxu0 %v481
    %v904 = vpop.f32.mrb[0].mxu0
    %v905 = vadd.f32 %v478, %v904
    %v906 = vpop.f32.mrb[0].mxu0
    %v907 = vadd.f32 %v478, %v906
    %908 = vdwg.mxu0
    %909 = vmatprep.subr.mxu0 %v422
    %910 = vmatpush1.msra.mxu0 %v421
    %911 = vmatprep.subr.mxu0 %v438
    %912 = vmatpush1.msra.mxu0 %v437
    %913 = vmatprep.subr.mxu0 %v454
    %914 = vmatpush1.msra.mxu0 %v453
    %915 = vmatprep.subr.mxu0 %v470
    %916 = vmatpush1.msra.mxu0 %v469
    %917 = vmatprep.subr.mxu0 0.0
    %918 = vmatpush1.msra.mxu0 0.0
    %919 = vmatprep.subr.mxu0 0.0
    %920 = vmatpush1.msra.mxu0 0.0
    %921 = vmatprep.subr.mxu0 0.0
    %922 = vmatpush1.msra.mxu0 0.0
    %923 = vmatprep.subr.mxu0 0.0
    %924 = vmatpush1.msra.mxu0 0.0
    %925 = vmatprep.subr.mxu0 0.0
    %926 = vmatpush1.msra.mxu0 0.0
    %927 = vmatprep.subr.mxu0 0.0
    %928 = vmatpush1.msra.mxu0 0.0
    %929 = vmatprep.subr.mxu0 0.0
    %930 = vmatpush1.msra.mxu0 0.0
    %931 = vmatprep.subr.mxu0 0.0
    %932 = vmatpush1.msra.mxu0 0.0
    %933 = vmatprep.subr.mxu0 0.0
    %934 = vmatpush1.msra.mxu0 0.0
    %935 = vmatprep.subr.mxu0 0.0
    %936 = vmatpush1.msra.mxu0 0.0
    %937 = vmatprep.subr.mxu0 0.0
    %938 = vmatpush1.msra.mxu0 0.0
    %939 = vmatprep.subr.mxu0 0.0
    %940 = vmatpush1.msra.mxu0 0.0
    %941 = vmatprep.subr.mxu0 0.0
    %942 = vmatpush1.msra.mxu0 0.0
    %943 = vmatprep.subr.mxu0 0.0
    %944 = vmatpush1.msra.mxu0 0.0
    %945 = vmatprep.subr.mxu0 0.0
    %946 = vmatpush1.msra.mxu0 0.0
    %947 = vmatprep.subr.mxu0 0.0
    %948 = vmatpush1.msra.mxu0 0.0
    %949 = vmatprep.subr.mxu0 0.0
    %950 = vmatpush1.msra.mxu0 0.0
    %951 = vmatprep.subr.mxu0 0.0
    %952 = vmatpush1.msra.mxu0 0.0
    %953 = vmatprep.subr.mxu0 0.0
    %954 = vmatpush1.msra.mxu0 0.0
    %955 = vmatprep.subr.mxu0 0.0
    %956 = vmatpush1.msra.mxu0 0.0
    %957 = vmatprep.subr.mxu0 0.0
    %958 = vmatpush1.msra.mxu0 0.0
    %959 = vmatprep.subr.mxu0 0.0
    %960 = vmatpush1.msra.mxu0 0.0
    %961 = vmatprep.subr.mxu0 0.0
    %962 = vmatpush1.msra.mxu0 0.0
    %963 = vmatprep.subr.mxu0 0.0
    %964 = vmatpush1.msra.mxu0 0.0
    %965 = vmatprep.subr.mxu0 0.0
    %966 = vmatpush1.msra.mxu0 0.0
    %967 = vmatprep.subr.mxu0 0.0
    %968 = vmatpush1.msra.mxu0 0.0
    %969 = vmatprep.subr.mxu0 0.0
    %970 = vmatpush1.msra.mxu0 0.0
    %971 = vmatprep.subr.mxu0 0.0
    %972 = vmatpush1.msra.mxu0 0.0
    %973 = vmatprep.mubr.f32.mxu0 0.0
    %974 = vmatmul.mubr.f32.gmra.mrb[0].mxu0 %v481
    %v975 = vpop.f32.mrb[0].mxu0
    %v976 = vadd.f32 %v478, %v975
    %v977 = vpop.f32.mrb[0].mxu0
    %v978 = vadd.f32 %v478, %v977
    %979 = vdwg.mxu0
    %980 = vmatprep.subr.mxu0 %v424
    %981 = vmatpush1.msra.mxu0 %v423
    %982 = vmatprep.subr.mxu0 %v440
    %983 = vmatpush1.msra.mxu0 %v439
    %984 = vmatprep.subr.mxu0 %v456
    %985 = vmatpush1.msra.mxu0 %v455
    %986 = vmatprep.subr.mxu0 %v472
    %987 = vmatpush1.msra.mxu0 %v471
    %988 = vmatprep.subr.mxu0 0.0
    %989 = vmatpush1.msra.mxu0 0.0
    %990 = vmatprep.subr.mxu0 0.0
    %991 = vmatpush1.msra.mxu0 0.0
    %992 = vmatprep.subr.mxu0 0.0
    %993 = vmatpush1.msra.mxu0 0.0
    %994 = vmatprep.subr.mxu0 0.0
    %995 = vmatpush1.msra.mxu0 0.0
    %996 = vmatprep.subr.mxu0 0.0
    %997 = vmatpush1.msra.mxu0 0.0
    %998 = vmatprep.subr.mxu0 0.0
    %999 = vmatpush1.msra.mxu0 0.0
    %1000 = vmatprep.subr.mxu0 0.0
    %1001 = vmatpush1.msra.mxu0 0.0
    %1002 = vmatprep.subr.mxu0 0.0
    %1003 = vmatpush1.msra.mxu0 0.0
    %1004 = vmatprep.subr.mxu0 0.0
    %1005 = vmatpush1.msra.mxu0 0.0
    %1006 = vmatprep.subr.mxu0 0.0
    %1007 = vmatpush1.msra.mxu0 0.0
    %1008 = vmatprep.subr.mxu0 0.0
    %1009 = vmatpush1.msra.mxu0 0.0
    %1010 = vmatprep.subr.mxu0 0.0
    %1011 = vmatpush1.msra.mxu0 0.0
    %1012 = vmatprep.subr.mxu0 0.0
    %1013 = vmatpush1.msra.mxu0 0.0
    %1014 = vmatprep.subr.mxu0 0.0
    %1015 = vmatpush1.msra.mxu0 0.0
    %1016 = vmatprep.subr.mxu0 0.0
    %1017 = vmatpush1.msra.mxu0 0.0
    %1018 = vmatprep.subr.mxu0 0.0
    %1019 = vmatpush1.msra.mxu0 0.0
    %1020 = vmatprep.subr.mxu0 0.0
    %1021 = vmatpush1.msra.mxu0 0.0
    %1022 = vmatprep.subr.mxu0 0.0
    %1023 = vmatpush1.msra.mxu0 0.0
    %1024 = vmatprep.subr.mxu0 0.0
    %1025 = vmatpush1.msra.mxu0 0.0
    %1026 = vmatprep.subr.mxu0 0.0
    %1027 = vmatpush1.msra.mxu0 0.0
    %1028 = vmatprep.subr.mxu0 0.0
    %1029 = vmatpush1.msra.mxu0 0.0
    %1030 = vmatprep.subr.mxu0 0.0
    %1031 = vmatpush1.msra.mxu0 0.0
    %1032 = vmatprep.subr.mxu0 0.0
    %1033 = vmatpush1.msra.mxu0 0.0
    %1034 = vmatprep.subr.mxu0 0.0
    %1035 = vmatpush1.msra.mxu0 0.0
    %1036 = vmatprep.subr.mxu0 0.0
    %1037 = vmatpush1.msra.mxu0 0.0
    %1038 = vmatprep.subr.mxu0 0.0
    %1039 = vmatpush1.msra.mxu0 0.0
    %1040 = vmatprep.subr.mxu0 0.0
    %1041 = vmatpush1.msra.mxu0 0.0
    %1042 = vmatprep.subr.mxu0 0.0
    %1043 = vmatpush1.msra.mxu0 0.0
    %1044 = vmatprep.mubr.f32.mxu0 0.0
    %1045 = vmatmul.mubr.f32.gmra.mrb[0].mxu0 %v481
    %v1046 = vpop.f32.mrb[0].mxu0
    %v1047 = vadd.f32 %v478, %v1046
    %v1048 = vpop.f32.mrb[0].mxu0
    %v1049 = vadd.f32 %v478, %v1048
    %1050 = vdwg.mxu0
    %v1051 = vsel %vm84, %v550, -inf
    %v1052 = vrot.slane %v1051, 4
    %v1053 = vmax.f32 %v1051, %v1052
    %v1054 = vrot.slane %v1053, 2
    %v1055 = vmax.f32 %v1053, %v1054
    %v1056 = vrot.slane %v1055, 1
    %v1057 = vmax.f32 %v1055, %v1056
    %v1058 = vsel %vm84, %v552, -inf
    %v1059 = vrot.slane %v1058, 4
    %v1060 = vmax.f32 %v1058, %v1059
    %v1061 = vrot.slane %v1060, 2
    %v1062 = vmax.f32 %v1060, %v1061
    %v1063 = vrot.slane %v1062, 1
    %v1064 = vmax.f32 %v1062, %v1063
    %v1065 = vsel %vm84, %v621, -inf
    %v1066 = vrot.slane %v1065, 4
    %v1067 = vmax.f32 %v1065, %v1066
    %v1068 = vrot.slane %v1067, 2
    %v1069 = vmax.f32 %v1067, %v1068
    %v1070 = vrot.slane %v1069, 1
    %v1071 = vmax.f32 %v1069, %v1070
    %v1072 = vsel %vm84, %v623, -inf
    %v1073 = vrot.slane %v1072, 4
    %v1074 = vmax.f32 %v1072, %v1073
    %v1075 = vrot.slane %v1074, 2
    %v1076 = vmax.f32 %v1074, %v1075
    %v1077 = vrot.slane %v1076, 1
    %v1078 = vmax.f32 %v1076, %v1077
    %v1079 = vsel %vm84, %v692, -inf
    %v1080 = vrot.slane %v1079, 4
    %v1081 = vmax.f32 %v1079, %v1080
    %v1082 = vrot.slane %v1081, 2
    %v1083 = vmax.f32 %v1081, %v1082
    %v1084 = vrot.slane %v1083, 1
    %v1085 = vmax.f32 %v1083, %v1084
    %v1086 = vsel %vm84, %v694, -inf
    %v1087 = vrot.slane %v1086, 4
    %v1088 = vmax.f32 %v1086, %v1087
    %v1089 = vrot.slane %v1088, 2
    %v1090 = vmax.f32 %v1088, %v1089
    %v1091 = vrot.slane %v1090, 1
    %v1092 = vmax.f32 %v1090, %v1091
    %v1093 = vsel %vm84, %v763, -inf
    %v1094 = vrot.slane %v1093, 4
    %v1095 = vmax.f32 %v1093, %v1094
    %v1096 = vrot.slane %v1095, 2
    %v1097 = vmax.f32 %v1095, %v1096
    %v1098 = vrot.slane %v1097, 1
    %v1099 = vmax.f32 %v1097, %v1098
    %v1100 = vsel %vm84, %v765, -inf
    %v1101 = vrot.slane %v1100, 4
    %v1102 = vmax.f32 %v1100, %v1101
    %v1103 = vrot.slane %v1102, 2
    %v1104 = vmax.f32 %v1102, %v1103
    %v1105 = vrot.slane %v1104, 1
    %v1106 = vmax.f32 %v1104, %v1105
    %v1107 = vsel %vm84, %v834, -inf
    %v1108 = vrot.slane %v1107, 4
    %v1109 = vmax.f32 %v1107, %v1108
    %v1110 = vrot.slane %v1109, 2
    %v1111 = vmax.f32 %v1109, %v1110
    %v1112 = vrot.slane %v1111, 1
    %v1113 = vmax.f32 %v1111, %v1112
    %v1114 = vsel %vm84, %v836, -inf
    %v1115 = vrot.slane %v1114, 4
    %v1116 = vmax.f32 %v1114, %v1115
    %v1117 = vrot.slane %v1116, 2
    %v1118 = vmax.f32 %v1116, %v1117
    %v1119 = vrot.slane %v1118, 1
    %v1120 = vmax.f32 %v1118, %v1119
    %v1121 = vsel %vm84, %v905, -inf
    %v1122 = vrot.slane %v1121, 4
    %v1123 = vmax.f32 %v1121, %v1122
    %v1124 = vrot.slane %v1123, 2
    %v1125 = vmax.f32 %v1123, %v1124
    %v1126 = vrot.slane %v1125, 1
    %v1127 = vmax.f32 %v1125, %v1126
    %v1128 = vsel %vm84, %v907, -inf
    %v1129 = vrot.slane %v1128, 4
    %v1130 = vmax.f32 %v1128, %v1129
    %v1131 = vrot.slane %v1130, 2
    %v1132 = vmax.f32 %v1130, %v1131
    %v1133 = vrot.slane %v1132, 1
    %v1134 = vmax.f32 %v1132, %v1133
    %v1135 = vsel %vm84, %v976, -inf
    %v1136 = vrot.slane %v1135, 4
    %v1137 = vmax.f32 %v1135, %v1136
    %v1138 = vrot.slane %v1137, 2
    %v1139 = vmax.f32 %v1137, %v1138
    %v1140 = vrot.slane %v1139, 1
    %v1141 = vmax.f32 %v1139, %v1140
    %v1142 = vsel %vm84, %v978, -inf
    %v1143 = vrot.slane %v1142, 4
    %v1144 = vmax.f32 %v1142, %v1143
    %v1145 = vrot.slane %v1144, 2
    %v1146 = vmax.f32 %v1144, %v1145
    %v1147 = vrot.slane %v1146, 1
    %v1148 = vmax.f32 %v1146, %v1147
    %v1149 = vsel %vm84, %v1047, -inf
    %v1150 = vrot.slane %v1149, 4
    %v1151 = vmax.f32 %v1149, %v1150
    %v1152 = vrot.slane %v1151, 2
    %v1153 = vmax.f32 %v1151, %v1152
    %v1154 = vrot.slane %v1153, 1
    %v1155 = vmax.f32 %v1153, %v1154
    %v1156 = vsel %vm84, %v1049, -inf
    %v1157 = vrot.slane %v1156, 4
    %v1158 = vmax.f32 %v1156, %v1157
    %v1159 = vrot.slane %v1158, 2
    %v1160 = vmax.f32 %v1158, %v1159
    %v1161 = vrot.slane %v1160, 1
    %v1162 = vmax.f32 %v1160, %v1161
    %v1163 = vsub.f32 %v550, %v1057
    %v1164 = vsub.f32 %v552, %v1064
    %v1165 = vsub.f32 %v621, %v1071
    %v1166 = vsub.f32 %v623, %v1078
    %v1167 = vsub.f32 %v692, %v1085
    %v1168 = vsub.f32 %v694, %v1092
    %v1169 = vsub.f32 %v763, %v1099
    %v1170 = vsub.f32 %v765, %v1106
    %v1171 = vsub.f32 %v834, %v1113
    %v1172 = vsub.f32 %v836, %v1120
    %v1173 = vsub.f32 %v905, %v1127
    %v1174 = vsub.f32 %v907, %v1134
    %v1175 = vsub.f32 %v976, %v1141
    %v1176 = vsub.f32 %v978, %v1148
    %v1177 = vsub.f32 %v1047, %v1155
    %v1178 = vsub.f32 %v1049, %v1162
    %v1179 = vmul.f32 %v1163, 1.442695
    %v1180 = vpow.pop %v1179
    %v1181 = vmul.f32 %v1164, 1.442695
    %v1182 = vpow.pop %v1181
    %v1183 = vmul.f32 %v1165, 1.442695
    %v1184 = vpow.pop %v1183
    %v1185 = vmul.f32 %v1166, 1.442695
    %v1186 = vpow.pop %v1185
    %v1187 = vmul.f32 %v1167, 1.442695
    %v1188 = vpow.pop %v1187
    %v1189 = vmul.f32 %v1168, 1.442695
    %v1190 = vpow.pop %v1189
    %v1191 = vmul.f32 %v1169, 1.442695
    %v1192 = vpow.pop %v1191
    %v1193 = vmul.f32 %v1170, 1.442695
    %v1194 = vpow.pop %v1193
    %v1195 = vmul.f32 %v1171, 1.442695
    %v1196 = vpow.pop %v1195
    %v1197 = vmul.f32 %v1172, 1.442695
    %v1198 = vpow.pop %v1197
    %v1199 = vmul.f32 %v1173, 1.442695
    %v1200 = vpow.pop %v1199
    %v1201 = vmul.f32 %v1174, 1.442695
    %v1202 = vpow.pop %v1201
    %v1203 = vmul.f32 %v1175, 1.442695
    %v1204 = vpow.pop %v1203
    %v1205 = vmul.f32 %v1176, 1.442695
    %v1206 = vpow.pop %v1205
    %v1207 = vmul.f32 %v1177, 1.442695
    %v1208 = vpow.pop %v1207
    %v1209 = vmul.f32 %v1178, 1.442695
    %v1210 = vpow.pop %v1209
    %v1211 = vsel %vm84, %v1180, 0.0
    %v1212 = vrot.slane %v1211, 4
    %v1213 = vadd.f32 %v1211, %v1212
    %v1214 = vrot.slane %v1213, 2
    %v1215 = vadd.f32 %v1213, %v1214
    %v1216 = vrot.slane %v1215, 1
    %v1217 = vadd.f32 %v1215, %v1216
    %v1218 = vsel %vm84, %v1182, 0.0
    %v1219 = vrot.slane %v1218, 4
    %v1220 = vadd.f32 %v1218, %v1219
    %v1221 = vrot.slane %v1220, 2
    %v1222 = vadd.f32 %v1220, %v1221
    %v1223 = vrot.slane %v1222, 1
    %v1224 = vadd.f32 %v1222, %v1223
    %v1225 = vsel %vm84, %v1184, 0.0
    %v1226 = vrot.slane %v1225, 4
    %v1227 = vadd.f32 %v1225, %v1226
    %v1228 = vrot.slane %v1227, 2
    %v1229 = vadd.f32 %v1227, %v1228
    %v1230 = vrot.slane %v1229, 1
    %v1231 = vadd.f32 %v1229, %v1230
    %v1232 = vsel %vm84, %v1186, 0.0
    %v1233 = vrot.slane %v1232, 4
    %v1234 = vadd.f32 %v1232, %v1233
    %v1235 = vrot.slane %v1234, 2
    %v1236 = vadd.f32 %v1234, %v1235
    %v1237 = vrot.slane %v1236, 1
    %v1238 = vadd.f32 %v1236, %v1237
    %v1239 = vsel %vm84, %v1188, 0.0
    %v1240 = vrot.slane %v1239, 4
    %v1241 = vadd.f32 %v1239, %v1240
    %v1242 = vrot.slane %v1241, 2
    %v1243 = vadd.f32 %v1241, %v1242
    %v1244 = vrot.slane %v1243, 1
    %v1245 = vadd.f32 %v1243, %v1244
    %v1246 = vsel %vm84, %v1190, 0.0
    %v1247 = vrot.slane %v1246, 4
    %v1248 = vadd.f32 %v1246, %v1247
    %v1249 = vrot.slane %v1248, 2
    %v1250 = vadd.f32 %v1248, %v1249
    %v1251 = vrot.slane %v1250, 1
    %v1252 = vadd.f32 %v1250, %v1251
    %v1253 = vsel %vm84, %v1192, 0.0
    %v1254 = vrot.slane %v1253, 4
    %v1255 = vadd.f32 %v1253, %v1254
    %v1256 = vrot.slane %v1255, 2
    %v1257 = vadd.f32 %v1255, %v1256
    %v1258 = vrot.slane %v1257, 1
    %v1259 = vadd.f32 %v1257, %v1258
    %v1260 = vsel %vm84, %v1194, 0.0
    %v1261 = vrot.slane %v1260, 4
    %v1262 = vadd.f32 %v1260, %v1261
    %v1263 = vrot.slane %v1262, 2
    %v1264 = vadd.f32 %v1262, %v1263
    %v1265 = vrot.slane %v1264, 1
    %v1266 = vadd.f32 %v1264, %v1265
    %v1267 = vsel %vm84, %v1196, 0.0
    %v1268 = vrot.slane %v1267, 4
    %v1269 = vadd.f32 %v1267, %v1268
    %v1270 = vrot.slane %v1269, 2
    %v1271 = vadd.f32 %v1269, %v1270
    %v1272 = vrot.slane %v1271, 1
    %v1273 = vadd.f32 %v1271, %v1272
    %v1274 = vsel %vm84, %v1198, 0.0
    %v1275 = vrot.slane %v1274, 4
    %v1276 = vadd.f32 %v1274, %v1275
    %v1277 = vrot.slane %v1276, 2
    %v1278 = vadd.f32 %v1276, %v1277
    %v1279 = vrot.slane %v1278, 1
    %v1280 = vadd.f32 %v1278, %v1279
    %v1281 = vsel %vm84, %v1200, 0.0
    %v1282 = vrot.slane %v1281, 4
    %v1283 = vadd.f32 %v1281, %v1282
    %v1284 = vrot.slane %v1283, 2
    %v1285 = vadd.f32 %v1283, %v1284
    %v1286 = vrot.slane %v1285, 1
    %v1287 = vadd.f32 %v1285, %v1286
    %v1288 = vsel %vm84, %v1202, 0.0
    %v1289 = vrot.slane %v1288, 4
    %v1290 = vadd.f32 %v1288, %v1289
    %v1291 = vrot.slane %v1290, 2
    %v1292 = vadd.f32 %v1290, %v1291
    %v1293 = vrot.slane %v1292, 1
    %v1294 = vadd.f32 %v1292, %v1293
    %v1295 = vsel %vm84, %v1204, 0.0
    %v1296 = vrot.slane %v1295, 4
    %v1297 = vadd.f32 %v1295, %v1296
    %v1298 = vrot.slane %v1297, 2
    %v1299 = vadd.f32 %v1297, %v1298
    %v1300 = vrot.slane %v1299, 1
    %v1301 = vadd.f32 %v1299, %v1300
    %v1302 = vsel %vm84, %v1206, 0.0
    %v1303 = vrot.slane %v1302, 4
    %v1304 = vadd.f32 %v1302, %v1303
    %v1305 = vrot.slane %v1304, 2
    %v1306 = vadd.f32 %v1304, %v1305
    %v1307 = vrot.slane %v1306, 1
    %v1308 = vadd.f32 %v1306, %v1307
    %v1309 = vsel %vm84, %v1208, 0.0
    %v1310 = vrot.slane %v1309, 4
    %v1311 = vadd.f32 %v1309, %v1310
    %v1312 = vrot.slane %v1311, 2
    %v1313 = vadd.f32 %v1311, %v1312
    %v1314 = vrot.slane %v1313, 1
    %v1315 = vadd.f32 %v1313, %v1314
    %v1316 = vsel %vm84, %v1210, 0.0
    %v1317 = vrot.slane %v1316, 4
    %v1318 = vadd.f32 %v1316, %v1317
    %v1319 = vrot.slane %v1318, 2
    %v1320 = vadd.f32 %v1318, %v1319
    %v1321 = vrot.slane %v1320, 1
    %v1322 = vadd.f32 %v1320, %v1321
    %v1323 = vrcp.pop %v1217
    %v1324 = vmul.f32 %v1180, %v1323
    %v1325 = vrcp.pop %v1224
    %v1326 = vmul.f32 %v1182, %v1325
    %v1327 = vrcp.pop %v1231
    %v1328 = vmul.f32 %v1184, %v1327
    %v1329 = vrcp.pop %v1238
    %v1330 = vmul.f32 %v1186, %v1329
    %v1331 = vrcp.pop %v1245
    %v1332 = vmul.f32 %v1188, %v1331
    %v1333 = vrcp.pop %v1252
    %v1334 = vmul.f32 %v1190, %v1333
    %v1335 = vrcp.pop %v1259
    %v1336 = vmul.f32 %v1192, %v1335
    %v1337 = vrcp.pop %v1266
    %v1338 = vmul.f32 %v1194, %v1337
    %v1339 = vrcp.pop %v1273
    %v1340 = vmul.f32 %v1196, %v1339
    %v1341 = vrcp.pop %v1280
    %v1342 = vmul.f32 %v1198, %v1341
    %v1343 = vrcp.pop %v1287
    %v1344 = vmul.f32 %v1200, %v1343
    %v1345 = vrcp.pop %v1294
    %v1346 = vmul.f32 %v1202, %v1345
    %v1347 = vrcp.pop %v1301
    %v1348 = vmul.f32 %v1204, %v1347
    %v1349 = vrcp.pop %v1308
    %v1350 = vmul.f32 %v1206, %v1349
    %v1351 = vrcp.pop %v1315
    %v1352 = vmul.f32 %v1208, %v1351
    %v1353 = vrcp.pop %v1322
    %v1354 = vmul.f32 %v1210, %v1353
    %v1355 = vadd.f32 %v1324, %v1328
    %v1356 = vadd.f32 %v1326, %v1330
    %v1357 = vadd.f32 %v1355, %v1332
    %v1358 = vadd.f32 %v1356, %v1334
    %v1359 = vadd.f32 %v1357, %v1336
    %v1360 = vadd.f32 %v1358, %v1338
    %v1361 = vadd.f32 %v1359, %v1340
    %v1362 = vadd.f32 %v1360, %v1342
    %v1363 = vadd.f32 %v1361, %v1344
    %v1364 = vadd.f32 %v1362, %v1346
    %v1365 = vadd.f32 %v1363, %v1348
    %v1366 = vadd.f32 %v1364, %v1350
    %v1367 = vadd.f32 %v1365, %v1352
    %v1368 = vadd.f32 %v1366, %v1354
    %v1369 = vmul.f32 %v1367, 0.125
    %v1370 = vmul.f32 %v1368, 0.125
    %v1371 = vmax.f32 %v1369, 1e-30
    %v1372 = vmax.f32 %v1370, 1e-30
    %v1373 = vlog2.pop %v1371
    %v1374 = vmul.f32 %v1373, 0.6931472
    %v1375 = vlog2.pop %v1372
    %v1376 = vmul.f32 %v1375, 0.6931472
    %v1377 = vmul.f32 %v1369, %v1374
    %v1378 = vmul.f32 %v1370, %v1376
    %v1379 = vsel %vm84, %v1377, 0.0
    %v1380 = vrot.slane %v1379, 4
    %v1381 = vadd.f32 %v1379, %v1380
    %v1382 = vrot.slane %v1381, 2
    %v1383 = vadd.f32 %v1381, %v1382
    %v1384 = vrot.slane %v1383, 1
    %v1385 = vadd.f32 %v1383, %v1384
    %v1386 = vsel %vm84, %v1378, 0.0
    %v1387 = vrot.slane %v1386, 4
    %v1388 = vadd.f32 %v1386, %v1387
    %v1389 = vrot.slane %v1388, 2
    %v1390 = vadd.f32 %v1388, %v1389
    %v1391 = vrot.slane %v1390, 1
    %v1392 = vadd.f32 %v1390, %v1391
    %v1393 = vsub.f32 0.0, %v1385
    %v1394 = vsub.f32 0.0, %v1392
    %v1395 = vmul.f32 %v1393, %v1393
    %v1396 = vmul.f32 %v1394, %v1394
    %vm1397 = vcmask 1040384
    %v1398 = vsel %vm1397, %v1395, 0.0
    %v1399 = vsel %vm1397, %v1396, 0.0
    %v1400 = vadd.f32 %v1398, %v1399
    %1401 = vadd.xlane.f32.xlu0 %v1400
    %v1402 = vpop.xlane.xlu0 %1401
    %v1403 = vrot.slane %v1402, 4
    %v1404 = vadd.f32 %v1402, %v1403
    %v1405 = vrot.slane %v1404, 2
    %v1406 = vadd.f32 %v1404, %v1405
    %v1407 = vrot.slane %v1406, 1
    %v1408 = vadd.f32 %v1406, %v1407
    %s1409 = vtos %v1408
    %v1410 = vstv %s1409
    %v1411 = vrsqrt.pop %v1410
    %v1412 = vmul.f32 %v1410, %v1411
    %vm1413 = vcmp.eq.f32.partialorder %v1410, inf
    %v1414 = vsel %vm1413, %v1410, %v1412
    %vm1415 = vcmp.eq.f32.partialorder %v1410, 0.0
    %v1416 = vand.u32 %v1410, 2147483648
    %v1417 = vsel %vm1415, %v1416, %v1414
    %s1418 = vtos %v1417
    %s1419 = scalar_lea.smem [#allocation5], 0
    %1420 = sst [smem:[%s1419]] %s1418
    // Predicated region
    $region30: #{dropout_entropy_detector_forward.1} parent=1 // pred_check
      _
    $region31: #{dropout_entropy_detector_forward.1} parent=1 // pred_check_branch
      %1422 = sbr.rel (0) target = $region33
    $region32: #{dropout_entropy_detector_forward.1} parent=1 // pred_region
      %s1424 = ssub.s32 16, 16
      %1425 = vsyncadd [#allocation4], %s1424
      %1428 = dma.smem_to_hbm [#allocation5], 16, %s6, [#allocation4]
    $region33: #{dropout_entropy_detector_forward.1} parent=1 // pred_fallthru
      _
    // Predicated region
    $region34: #{dropout_entropy_detector_forward.1} parent=1 // pred_check
      _
    $region35: #{dropout_entropy_detector_forward.1} parent=1 // pred_check_branch
      %1430 = sbr.rel (0) target = $region37
    $region36: #{dropout_entropy_detector_forward.1} parent=1 // pred_region
      _
    $region37: #{dropout_entropy_detector_forward.1} parent=1 // pred_fallthru
      _
    // Predicated region
    $region38: #{dropout_entropy_detector_forward.1} parent=1 // pred_check
      _
    $region39: #{dropout_entropy_detector_forward.1} parent=1 // pred_check_branch
      %1432 = sbr.rel (0) target = $region41
    $region40: #{dropout_entropy_detector_forward.1} parent=1 // pred_region
      %1433 = dma.done [#allocation4], 16
    $region41: #{dropout_entropy_detector_forward.1} parent=1 // pred_fallthru
      _
    // Predicated region
    $region42: #{dropout_entropy_detector_forward.1} parent=1 // pred_check
      _
    $region43: #{dropout_entropy_detector_forward.1} parent=1 // pred_check_branch
      %1435 = sbr.rel (0) target = $region45
    $region44: #{dropout_entropy_detector_forward.1} parent=1 // pred_region
      _
    $region45: #{dropout_entropy_detector_forward.1} parent=1 // pred_fallthru
      _
    %1436 = sfence
    %1437 = vsyncpa [#allocation3], 1
    %1438 = vsyncpa [#allocation4], 1

</llo_original>
